<compile_context>
chip_gen: v7x
topology: tpu7x:2x2x1
jax: 0.10.0
libtpu: 0.0.40
codegen_flags: <defaults>
</compile_context>

<pallas_src>
import functools

import jax
import jax.numpy as jnp
import numpy as np
from jax import lax
from jax.experimental import pallas as pl
from jax.experimental.pallas import tpu as pltpu


def _silu(x):
    return x * jax.nn.sigmoid(x)


def head_kernel(x_ref,
                dw1_w, dw1_b,
                pw1_w, pw1_b,
                dw2_w, dw2_b,
                pw2_w, pw2_b,
                fin_w, fin_b,
                out_ref, *, H, W, act_dtype):
    """One batch-image grid step.

    x_ref   : (Cin, H*W) f32        full image, spatial flattened (lane-dense)
    dw*_w   : (C, 9) f32            depthwise taps (BN scale folded), tap t = (dy+1)*3+(dx+1)
    pw*_w   : (Cout, Cin) act_dtype pointwise weights (BN scale folded, pre-cast)
    *_b     : (C, 1) f32            folded BN shift
    fin_w   : (NCpad, Cmid) act_dtype ; fin_b : (NCpad, 1) f32
    out_ref : (NCpad, H*W) f32      lane-dense output slab
    """
    S = H * W
    x = x_ref[...]

    # Boundary masks: computed once, reused by both depthwise layers.
    col = lax.broadcasted_iota(jnp.int32, (1, S), 1)
    if (W & (W - 1)) == 0:                      # power of two: avoid int div/mod
        xcol = col & (W - 1)
        grow = col >> (W.bit_length() - 1)
    else:
        xcol = col % W
        grow = col // W
    row_masks = (grow >= 1, None, grow <= H - 2)   # source row valid for dy = -1, 0, +1
    col_masks = (xcol >= 1, None, xcol <= W - 2)   # source col valid for dx = -1, 0, +1
    masks = []
    for rm in row_masks:
        for cm in col_masks:
            if rm is None:
                masks.append(cm)
            elif cm is None:
                masks.append(rm)
            else:
                masks.append(rm & cm)

    def dwconv_silu(v, w_ref, b_ref):
        wv = w_ref[...]                             # (c, 9)
        acc = jnp.zeros(v.shape, jnp.float32)
        t = 0
        for dy in (-1, 0, 1):
            for dx in (-1, 0, 1):
                m = dy * W + dx                     # flattened-spatial tap offset
                shifted = v if m == 0 else pltpu.roll(v, shift=(-m) % S, axis=1)
                mask = masks[t]
                tap = shifted if mask is None else jnp.where(mask, shifted, 0.0)
                acc = acc + tap * wv[:, t:t + 1]
                t += 1
        return _silu(acc + b_ref[...])

    def pwconv_silu(v, w_ref, b_ref):
        y = jnp.dot(w_ref[...], v.astype(act_dtype),
                    preferred_element_type=jnp.float32)
        return _silu(y + b_ref[...])

    y = dwconv_silu(x, dw1_w, dw1_b)                # (Cin,  S)
    y = pwconv_silu(y, pw1_w, pw1_b)                # (Cmid, S)
    y = dwconv_silu(y, dw2_w, dw2_b)                # (Cmid, S)
    y = pwconv_silu(y, pw2_w, pw2_b)                # (Cmid, S)
    z = jnp.dot(fin_w[...], y.astype(act_dtype),
                preferred_element_type=jnp.float32) + fin_b[...]
    out_ref[...] = z.astype(out_ref.dtype)          # dense, unmasked lane-wide store


def _wspec(shape):
    nd = len(shape)
    return pl.BlockSpec(shape, lambda b, _nd=nd: (0,) * _nd)


def yolo_v10_cls_head(x_nchw, params, *, matmul_dtype=jnp.bfloat16):
    """x_nchw: (N, Cin, H, W) float32 -> (N, num_classes, H, W) float32."""
    n, cin, h, w = x_nchw.shape
    cmid = params["pw1_w"].shape[1]
    nc = params["fin_w"].shape[1]
    nc_pad = ((nc + 7) // 8) * 8                    # dense 8-sublane output store
    s = h * w

    # Free reshape only -- no pad / overlapping stack / transpose passes.
    x = x_nchw.reshape(n, cin, s).astype(jnp.float32)

    # One-time constant preprocessing: fold BN scale into the conv weights,
    # pad the classifier to a sublane multiple, pre-cast MXU operands.
    dw1_w = (params["dw1_w"].reshape(9, cin) * params["dw1_s"].reshape(1, cin)).T
    dw2_w = (params["dw2_w"].reshape(9, cmid) * params["dw2_s"].reshape(1, cmid)).T
    pw1_w = (params["pw1_w"].T * params["pw1_s"].reshape(cmid, 1)).astype(matmul_dtype)
    pw2_w = (params["pw2_w"].T * params["pw2_s"].reshape(cmid, 1)).astype(matmul_dtype)
    fin_w = jnp.pad(params["fin_w"].T, ((0, nc_pad - nc), (0, 0))).astype(matmul_dtype)
    fin_b = jnp.pad(params["fin_b"].reshape(nc, 1), ((0, nc_pad - nc), (0, 0)))

    wargs = [
        dw1_w.astype(jnp.float32), params["dw1_b"].reshape(cin, 1).astype(jnp.float32),
        pw1_w, params["pw1_b"].reshape(cmid, 1).astype(jnp.float32),
        dw2_w.astype(jnp.float32), params["dw2_b"].reshape(cmid, 1).astype(jnp.float32),
        pw2_w, params["pw2_b"].reshape(cmid, 1).astype(jnp.float32),
        fin_w, fin_b.astype(jnp.float32),
    ]

    in_specs = [pl.BlockSpec((pl.Squeezed(), cin, s), lambda b: (b, 0, 0))]
    in_specs += [_wspec(tuple(a.shape)) for a in wargs]
    out_spec = pl.BlockSpec((pl.Squeezed(), nc_pad, s), lambda b: (b, 0, 0))

    kern = functools.partial(head_kernel, H=h, W=w, act_dtype=matmul_dtype)
    out = pl.pallas_call(
        kern,
        out_shape=jax.ShapeDtypeStruct((n, nc_pad, s), jnp.float32),
        grid_spec=pltpu.PrefetchScalarGridSpec(
            num_scalar_prefetch=0,
            grid=(n,),                              # batch steps: keeps both v7x TCs busy for N>=2
            in_specs=in_specs,
            out_specs=out_spec),
        compiler_params=pltpu.CompilerParams(
            dimension_semantics=("parallel",),
            vmem_limit_bytes=32 * 1024 * 1024),     # fits v7x's smaller scoped VMEM budget
    )(x, *wargs)

    return out[:, :nc, :].reshape(n, nc, h, w)


def init_params(key, cin, cmid, nc):
    ks = list(jax.random.split(key, 10))

    def bn_fold(k, c):
        kg, kb, km, kv = jax.random.split(k, 4)
        gamma = 1.0 + 0.1 * jax.random.normal(kg, (c,), jnp.float32)
        beta = 0.1 * jax.random.normal(kb, (c,), jnp.float32)
        mean = 0.1 * jax.random.normal(km, (c,), jnp.float32)
        var = jnp.abs(1.0 + 0.1 * jax.random.normal(kv, (c,), jnp.float32))
        scale = gamma / jnp.sqrt(var + 1e-5)
        bias = beta - mean * scale
        return scale.reshape(1, c), bias.reshape(1, c)

    p = {}
    p["dw1_w"] = 0.2 * jax.random.normal(ks[0], (3, 3, cin), jnp.float32)
    p["dw1_s"], p["dw1_b"] = bn_fold(ks[1], cin)
    p["pw1_w"] = 0.2 * jax.random.normal(ks[2], (cin, cmid), jnp.float32)
    p["pw1_s"], p["pw1_b"] = bn_fold(ks[3], cmid)
    p["dw2_w"] = 0.2 * jax.random.normal(ks[4], (3, 3, cmid), jnp.float32)
    p["dw2_s"], p["dw2_b"] = bn_fold(ks[5], cmid)
    p["pw2_w"] = 0.2 * jax.random.normal(ks[6], (cmid, cmid), jnp.float32)
    p["pw2_s"], p["pw2_b"] = bn_fold(ks[7], cmid)
    p["fin_w"] = 0.2 * jax.random.normal(ks[8], (cmid, nc), jnp.float32)
    p["fin_b"] = 0.1 * jax.random.normal(ks[9], (1, nc), jnp.float32)
    return p


def ref_forward(x_nchw, p):
    """Pure-JAX reference (lax conv), NCHW in / NCHW out."""
    x = jnp.transpose(x_nchw, (0, 2, 3, 1))
    dn = ("NHWC", "HWIO", "NHWC")

    def dw(x, w, s, b):
        c = x.shape[-1]
        k = w.reshape(3, 3, 1, c)
        y = lax.conv_general_dilated(x, k, (1, 1), "SAME",
                                     dimension_numbers=dn,
                                     feature_group_count=c)
        y = y * s.reshape(1, 1, 1, c) + b.reshape(1, 1, 1, c)
        return jax.nn.silu(y)

    def pw(x, w, s, b):
        y = jnp.einsum("nhwc,cd->nhwd", x, w)
        y = y * s.reshape(1, 1, 1, -1) + b.reshape(1, 1, 1, -1)
        return jax.nn.silu(y)

    y = dw(x, p["dw1_w"], p["dw1_s"], p["dw1_b"])
    y = pw(y, p["pw1_w"], p["pw1_s"], p["pw1_b"])
    y = dw(y, p["dw2_w"], p["dw2_s"], p["dw2_b"])
    y = pw(y, p["pw2_w"], p["pw2_s"], p["pw2_b"])
    z = jnp.einsum("nhwc,cd->nhwd", y, p["fin_w"]) + p["fin_b"].reshape(1, 1, 1, -1)
    return jnp.transpose(z, (0, 3, 1, 2))


if __name__ == "__main__":
    N, CIN, CMID, NC, H, W = 2, 8, 16, 10, 16, 16
    key = jax.random.PRNGKey(0)
    kx, kp = jax.random.split(key)
    x = jax.random.normal(kx, (N, CIN, H, W), jnp.float32)   # NCHW like PyTorch
    params = init_params(kp, CIN, CMID, NC)

    with jax.default_matmul_precision("float32"):
        ref = jax.block_until_ready(ref_forward(x, params))

    # f32 MXU operands (exact path).
    out32 = jax.block_until_ready(
        yolo_v10_cls_head(x, params, matmul_dtype=jnp.float32))
    assert out32.shape == (N, NC, H, W), out32.shape
    np.testing.assert_allclose(np.asarray(out32), np.asarray(ref),
                               rtol=1e-2, atol=1e-2)

    # bf16 MXU operands, f32 accumulation (default fast path on all chips,
    # including v5e: only MXU operands are bf16, element-wise math stays f32).
    outbf = jax.block_until_ready(yolo_v10_cls_head(x, params))
    np.testing.assert_allclose(np.asarray(outbf), np.asarray(ref),
                               rtol=5e-2, atol=5e-2)

    print("KERNEL_OK")
</pallas_src>

<mosaic_0001>
module attributes {stable_mosaic.version = 11 : i64} {
  func.func @head_kernel(%arg0: i32, %arg1: memref<1x8x256xf32, #tpu.memory_space<vmem>>, %arg2: memref<8x9xf32, #tpu.memory_space<vmem>>, %arg3: memref<8x1xf32, #tpu.memory_space<vmem>>, %arg4: memref<16x8xf32, #tpu.memory_space<vmem>>, %arg5: memref<16x1xf32, #tpu.memory_space<vmem>>, %arg6: memref<16x9xf32, #tpu.memory_space<vmem>>, %arg7: memref<16x1xf32, #tpu.memory_space<vmem>>, %arg8: memref<16x16xf32, #tpu.memory_space<vmem>>, %arg9: memref<16x1xf32, #tpu.memory_space<vmem>>, %arg10: memref<16x16xf32, #tpu.memory_space<vmem>>, %arg11: memref<16x1xf32, #tpu.memory_space<vmem>>, %arg12: memref<1x16x256xf32, #tpu.memory_space<vmem>>) attributes {dimension_semantics = [#tpu.dimension_semantics<parallel>], iteration_bounds = array<i64: 2>, scalar_prefetch = 0 : i64, scratch_operands = 0 : i64, tpu.core_type = #tpu.core_type<tc>, window_params = [{transform_indices = @transform_0, window_bounds = array<i64: 1, 8, 256>}, {pipeline_mode = #tpu.pipeline_mode<synchronous>, transform_indices = @transform_1, window_bounds = array<i64: 8, 9>}, {pipeline_mode = #tpu.pipeline_mode<synchronous>, transform_indices = @transform_2, window_bounds = array<i64: 8, 1>}, {pipeline_mode = #tpu.pipeline_mode<synchronous>, transform_indices = @transform_3, window_bounds = array<i64: 16, 8>}, {pipeline_mode = #tpu.pipeline_mode<synchronous>, transform_indices = @transform_4, window_bounds = array<i64: 16, 1>}, {pipeline_mode = #tpu.pipeline_mode<synchronous>, transform_indices = @transform_5, window_bounds = array<i64: 16, 9>}, {pipeline_mode = #tpu.pipeline_mode<synchronous>, transform_indices = @transform_6, window_bounds = array<i64: 16, 1>}, {pipeline_mode = #tpu.pipeline_mode<synchronous>, transform_indices = @transform_7, window_bounds = array<i64: 16, 16>}, {pipeline_mode = #tpu.pipeline_mode<synchronous>, transform_indices = @transform_8, window_bounds = array<i64: 16, 1>}, {pipeline_mode = #tpu.pipeline_mode<synchronous>, transform_indices = @transform_9, window_bounds = array<i64: 16, 16>}, {pipeline_mode = #tpu.pipeline_mode<synchronous>, transform_indices = @transform_10, window_bounds = array<i64: 16, 1>}, {transform_indices = @transform_11, window_bounds = array<i64: 1, 16, 256>}]} {
    %c0 = arith.constant 0 : index
    %c0_0 = arith.constant 0 : index
    %c0_1 = arith.constant 0 : index
    %0 = vector.load %arg1[%c0, %c0_0, %c0_1] : memref<1x8x256xf32, #tpu.memory_space<vmem>>, vector<1x8x256xf32>
    %1 = vector.shape_cast %0 : vector<1x8x256xf32> to vector<8x256xf32>
    %2 = tpu.iota {dimensions = array<i32: 1>} : vector<1x256xi32>
    %c15_i32 = arith.constant 15 : i32
    %3 = vector.broadcast %c15_i32 : i32 to vector<1x256xi32>
    %4 = arith.andi %2, %3 : vector<1x256xi32>
    %c4_i32 = arith.constant 4 : i32
    %5 = vector.broadcast %c4_i32 : i32 to vector<1x256xi32>
    %6 = arith.shrsi %2, %5 : vector<1x256xi32>
    %c1_i32 = arith.constant 1 : i32
    %7 = vector.broadcast %c1_i32 : i32 to vector<1x256xi32>
    %8 = arith.cmpi sge, %6, %7 : vector<1x256xi32>
    %c14_i32 = arith.constant 14 : i32
    %9 = vector.broadcast %c14_i32 : i32 to vector<1x256xi32>
    %10 = arith.cmpi sle, %6, %9 : vector<1x256xi32>
    %c1_i32_2 = arith.constant 1 : i32
    %11 = vector.broadcast %c1_i32_2 : i32 to vector<1x256xi32>
    %12 = arith.cmpi sge, %4, %11 : vector<1x256xi32>
    %c14_i32_3 = arith.constant 14 : i32
    %13 = vector.broadcast %c14_i32_3 : i32 to vector<1x256xi32>
    %14 = arith.cmpi sle, %4, %13 : vector<1x256xi32>
    %15 = arith.andi %8, %12 : vector<1x256xi1>
    %16 = arith.andi %8, %14 : vector<1x256xi1>
    %17 = arith.andi %10, %12 : vector<1x256xi1>
    %18 = arith.andi %10, %14 : vector<1x256xi1>
    %c0_4 = arith.constant 0 : index
    %c0_5 = arith.constant 0 : index
    %19 = vector.load %arg2[%c0_4, %c0_5] : memref<8x9xf32, #tpu.memory_space<vmem>>, vector<8x9xf32>
    %cst = arith.constant 0.000000e+00 : f32
    %20 = vector.broadcast %cst : f32 to vector<8x256xf32>
    %c17_i32 = arith.constant 17 : i32
    %21 = tpu.dynamic_rotate %1 by %c17_i32 dim 1 : vector<8x256xf32>, i32 -> vector<8x256xf32>
    %cst_6 = arith.constant 0.000000e+00 : f32
    %22 = vector.shape_cast %15 : vector<1x256xi1> to vector<1x256xi1>
    %23 = vector.broadcast %22 : vector<1x256xi1> to vector<8x256xi1>
    %24 = vector.broadcast %cst_6 : f32 to vector<8x256xf32>
    %25 = arith.select %23, %21, %24 : vector<8x256xi1>, vector<8x256xf32>
    %26 = vector.extract_strided_slice %19 {offsets = [0, 0], sizes = [8, 1], strides = [1, 1]} : vector<8x9xf32> to vector<8x1xf32>
    %27 = vector.broadcast %26 : vector<8x1xf32> to vector<8x256xf32>
    %28 = arith.mulf %25, %27 : vector<8x256xf32>
    %29 = arith.addf %20, %28 : vector<8x256xf32>
    %c16_i32 = arith.constant 16 : i32
    %30 = tpu.dynamic_rotate %1 by %c16_i32 dim 1 : vector<8x256xf32>, i32 -> vector<8x256xf32>
    %cst_7 = arith.constant 0.000000e+00 : f32
    %31 = vector.shape_cast %8 : vector<1x256xi1> to vector<1x256xi1>
    %32 = vector.broadcast %31 : vector<1x256xi1> to vector<8x256xi1>
    %33 = vector.broadcast %cst_7 : f32 to vector<8x256xf32>
    %34 = arith.select %32, %30, %33 : vector<8x256xi1>, vector<8x256xf32>
    %35 = vector.extract_strided_slice %19 {offsets = [0, 1], sizes = [8, 1], strides = [1, 1]} : vector<8x9xf32> to vector<8x1xf32>
    %36 = vector.broadcast %35 : vector<8x1xf32> to vector<8x256xf32>
    %37 = arith.mulf %34, %36 : vector<8x256xf32>
    %38 = arith.addf %29, %37 : vector<8x256xf32>
    %c15_i32_8 = arith.constant 15 : i32
    %39 = tpu.dynamic_rotate %1 by %c15_i32_8 dim 1 : vector<8x256xf32>, i32 -> vector<8x256xf32>
    %cst_9 = arith.constant 0.000000e+00 : f32
    %40 = vector.shape_cast %16 : vector<1x256xi1> to vector<1x256xi1>
    %41 = vector.broadcast %40 : vector<1x256xi1> to vector<8x256xi1>
    %42 = vector.broadcast %cst_9 : f32 to vector<8x256xf32>
    %43 = arith.select %41, %39, %42 : vector<8x256xi1>, vector<8x256xf32>
    %44 = vector.extract_strided_slice %19 {offsets = [0, 2], sizes = [8, 1], strides = [1, 1]} : vector<8x9xf32> to vector<8x1xf32>
    %45 = vector.broadcast %44 : vector<8x1xf32> to vector<8x256xf32>
    %46 = arith.mulf %43, %45 : vector<8x256xf32>
    %47 = arith.addf %38, %46 : vector<8x256xf32>
    %c1_i32_10 = arith.constant 1 : i32
    %48 = tpu.dynamic_rotate %1 by %c1_i32_10 dim 1 : vector<8x256xf32>, i32 -> vector<8x256xf32>
    %cst_11 = arith.constant 0.000000e+00 : f32
    %49 = vector.shape_cast %12 : vector<1x256xi1> to vector<1x256xi1>
    %50 = vector.broadcast %49 : vector<1x256xi1> to vector<8x256xi1>
    %51 = vector.broadcast %cst_11 : f32 to vector<8x256xf32>
    %52 = arith.select %50, %48, %51 : vector<8x256xi1>, vector<8x256xf32>
    %53 = vector.extract_strided_slice %19 {offsets = [0, 3], sizes = [8, 1], strides = [1, 1]} : vector<8x9xf32> to vector<8x1xf32>
    %54 = vector.broadcast %53 : vector<8x1xf32> to vector<8x256xf32>
    %55 = arith.mulf %52, %54 : vector<8x256xf32>
    %56 = arith.addf %47, %55 : vector<8x256xf32>
    %57 = vector.extract_strided_slice %19 {offsets = [0, 4], sizes = [8, 1], strides = [1, 1]} : vector<8x9xf32> to vector<8x1xf32>
    %58 = vector.broadcast %57 : vector<8x1xf32> to vector<8x256xf32>
    %59 = arith.mulf %1, %58 : vector<8x256xf32>
    %60 = arith.addf %56, %59 : vector<8x256xf32>
    %c255_i32 = arith.constant 255 : i32
    %61 = tpu.dynamic_rotate %1 by %c255_i32 dim 1 : vector<8x256xf32>, i32 -> vector<8x256xf32>
    %cst_12 = arith.constant 0.000000e+00 : f32
    %62 = vector.shape_cast %14 : vector<1x256xi1> to vector<1x256xi1>
    %63 = vector.broadcast %62 : vector<1x256xi1> to vector<8x256xi1>
    %64 = vector.broadcast %cst_12 : f32 to vector<8x256xf32>
    %65 = arith.select %63, %61, %64 : vector<8x256xi1>, vector<8x256xf32>
    %66 = vector.extract_strided_slice %19 {offsets = [0, 5], sizes = [8, 1], strides = [1, 1]} : vector<8x9xf32> to vector<8x1xf32>
    %67 = vector.broadcast %66 : vector<8x1xf32> to vector<8x256xf32>
    %68 = arith.mulf %65, %67 : vector<8x256xf32>
    %69 = arith.addf %60, %68 : vector<8x256xf32>
    %c241_i32 = arith.constant 241 : i32
    %70 = tpu.dynamic_rotate %1 by %c241_i32 dim 1 : vector<8x256xf32>, i32 -> vector<8x256xf32>
    %cst_13 = arith.constant 0.000000e+00 : f32
    %71 = vector.shape_cast %17 : vector<1x256xi1> to vector<1x256xi1>
    %72 = vector.broadcast %71 : vector<1x256xi1> to vector<8x256xi1>
    %73 = vector.broadcast %cst_13 : f32 to vector<8x256xf32>
    %74 = arith.select %72, %70, %73 : vector<8x256xi1>, vector<8x256xf32>
    %75 = vector.extract_strided_slice %19 {offsets = [0, 6], sizes = [8, 1], strides = [1, 1]} : vector<8x9xf32> to vector<8x1xf32>
    %76 = vector.broadcast %75 : vector<8x1xf32> to vector<8x256xf32>
    %77 = arith.mulf %74, %76 : vector<8x256xf32>
    %78 = arith.addf %69, %77 : vector<8x256xf32>
    %c240_i32 = arith.constant 240 : i32
    %79 = tpu.dynamic_rotate %1 by %c240_i32 dim 1 : vector<8x256xf32>, i32 -> vector<8x256xf32>
    %cst_14 = arith.constant 0.000000e+00 : f32
    %80 = vector.shape_cast %10 : vector<1x256xi1> to vector<1x256xi1>
    %81 = vector.broadcast %80 : vector<1x256xi1> to vector<8x256xi1>
    %82 = vector.broadcast %cst_14 : f32 to vector<8x256xf32>
    %83 = arith.select %81, %79, %82 : vector<8x256xi1>, vector<8x256xf32>
    %84 = vector.extract_strided_slice %19 {offsets = [0, 7], sizes = [8, 1], strides = [1, 1]} : vector<8x9xf32> to vector<8x1xf32>
    %85 = vector.broadcast %84 : vector<8x1xf32> to vector<8x256xf32>
    %86 = arith.mulf %83, %85 : vector<8x256xf32>
    %87 = arith.addf %78, %86 : vector<8x256xf32>
    %c239_i32 = arith.constant 239 : i32
    %88 = tpu.dynamic_rotate %1 by %c239_i32 dim 1 : vector<8x256xf32>, i32 -> vector<8x256xf32>
    %cst_15 = arith.constant 0.000000e+00 : f32
    %89 = vector.shape_cast %18 : vector<1x256xi1> to vector<1x256xi1>
    %90 = vector.broadcast %89 : vector<1x256xi1> to vector<8x256xi1>
    %91 = vector.broadcast %cst_15 : f32 to vector<8x256xf32>
    %92 = arith.select %90, %88, %91 : vector<8x256xi1>, vector<8x256xf32>
    %93 = vector.extract_strided_slice %19 {offsets = [0, 8], sizes = [8, 1], strides = [1, 1]} : vector<8x9xf32> to vector<8x1xf32>
    %94 = vector.broadcast %93 : vector<8x1xf32> to vector<8x256xf32>
    %95 = arith.mulf %92, %94 : vector<8x256xf32>
    %96 = arith.addf %87, %95 : vector<8x256xf32>
    %c0_16 = arith.constant 0 : index
    %c0_17 = arith.constant 0 : index
    %97 = vector.load %arg3[%c0_16, %c0_17] : memref<8x1xf32, #tpu.memory_space<vmem>>, vector<8x1xf32>
    %98 = vector.broadcast %97 : vector<8x1xf32> to vector<8x256xf32>
    %99 = arith.addf %96, %98 : vector<8x256xf32>
    %100 = arith.negf %99 : vector<8x256xf32>
    %101 = math.exp %100 : vector<8x256xf32>
    %cst_18 = arith.constant 1.000000e+00 : f32
    %102 = vector.broadcast %cst_18 : f32 to vector<8x256xf32>
    %103 = arith.addf %102, %101 : vector<8x256xf32>
    %104 = arith.divf %102, %103 : vector<8x256xf32>
    %105 = arith.mulf %99, %104 : vector<8x256xf32>
    %c0_19 = arith.constant 0 : index
    %c0_20 = arith.constant 0 : index
    %106 = vector.load %arg4[%c0_19, %c0_20] : memref<16x8xf32, #tpu.memory_space<vmem>>, vector<16x8xf32>
    %cst_21 = arith.constant dense<0.000000e+00> : vector<16x256xf32>
    %107 = tpu.matmul %106, %105, %cst_21 {dimension_numbers = #tpu.dot_dimension_numbers<[1], [0], [0], [1], [0, 0, 1, 1], [], []>} : vector<16x8xf32>, vector<8x256xf32>, vector<16x256xf32> -> vector<16x256xf32>
    %c0_22 = arith.constant 0 : index
    %c0_23 = arith.constant 0 : index
    %108 = vector.load %arg5[%c0_22, %c0_23] : memref<16x1xf32, #tpu.memory_space<vmem>>, vector<16x1xf32>
    %109 = vector.broadcast %108 : vector<16x1xf32> to vector<16x256xf32>
    %110 = arith.addf %107, %109 : vector<16x256xf32>
    %111 = arith.negf %110 : vector<16x256xf32>
    %112 = math.exp %111 : vector<16x256xf32>
    %cst_24 = arith.constant 1.000000e+00 : f32
    %113 = vector.broadcast %cst_24 : f32 to vector<16x256xf32>
    %114 = arith.addf %113, %112 : vector<16x256xf32>
    %115 = arith.divf %113, %114 : vector<16x256xf32>
    %116 = arith.mulf %110, %115 : vector<16x256xf32>
    %c0_25 = arith.constant 0 : index
    %c0_26 = arith.constant 0 : index
    %117 = vector.load %arg6[%c0_25, %c0_26] : memref<16x9xf32, #tpu.memory_space<vmem>>, vector<16x9xf32>
    %cst_27 = arith.constant 0.000000e+00 : f32
    %118 = vector.broadcast %cst_27 : f32 to vector<16x256xf32>
    %c17_i32_28 = arith.constant 17 : i32
    %119 = tpu.dynamic_rotate %116 by %c17_i32_28 dim 1 : vector<16x256xf32>, i32 -> vector<16x256xf32>
    %cst_29 = arith.constant 0.000000e+00 : f32
    %120 = vector.shape_cast %15 : vector<1x256xi1> to vector<1x256xi1>
    %121 = vector.broadcast %120 : vector<1x256xi1> to vector<16x256xi1>
    %122 = vector.broadcast %cst_29 : f32 to vector<16x256xf32>
    %123 = arith.select %121, %119, %122 : vector<16x256xi1>, vector<16x256xf32>
    %124 = vector.extract_strided_slice %117 {offsets = [0, 0], sizes = [16, 1], strides = [1, 1]} : vector<16x9xf32> to vector<16x1xf32>
    %125 = vector.broadcast %124 : vector<16x1xf32> to vector<16x256xf32>
    %126 = arith.mulf %123, %125 : vector<16x256xf32>
    %127 = arith.addf %118, %126 : vector<16x256xf32>
    %c16_i32_30 = arith.constant 16 : i32
    %128 = tpu.dynamic_rotate %116 by %c16_i32_30 dim 1 : vector<16x256xf32>, i32 -> vector<16x256xf32>
    %cst_31 = arith.constant 0.000000e+00 : f32
    %129 = vector.shape_cast %8 : vector<1x256xi1> to vector<1x256xi1>
    %130 = vector.broadcast %129 : vector<1x256xi1> to vector<16x256xi1>
    %131 = vector.broadcast %cst_31 : f32 to vector<16x256xf32>
    %132 = arith.select %130, %128, %131 : vector<16x256xi1>, vector<16x256xf32>
    %133 = vector.extract_strided_slice %117 {offsets = [0, 1], sizes = [16, 1], strides = [1, 1]} : vector<16x9xf32> to vector<16x1xf32>
    %134 = vector.broadcast %133 : vector<16x1xf32> to vector<16x256xf32>
    %135 = arith.mulf %132, %134 : vector<16x256xf32>
    %136 = arith.addf %127, %135 : vector<16x256xf32>
    %c15_i32_32 = arith.constant 15 : i32
    %137 = tpu.dynamic_rotate %116 by %c15_i32_32 dim 1 : vector<16x256xf32>, i32 -> vector<16x256xf32>
    %cst_33 = arith.constant 0.000000e+00 : f32
    %138 = vector.shape_cast %16 : vector<1x256xi1> to vector<1x256xi1>
    %139 = vector.broadcast %138 : vector<1x256xi1> to vector<16x256xi1>
    %140 = vector.broadcast %cst_33 : f32 to vector<16x256xf32>
    %141 = arith.select %139, %137, %140 : vector<16x256xi1>, vector<16x256xf32>
    %142 = vector.extract_strided_slice %117 {offsets = [0, 2], sizes = [16, 1], strides = [1, 1]} : vector<16x9xf32> to vector<16x1xf32>
    %143 = vector.broadcast %142 : vector<16x1xf32> to vector<16x256xf32>
    %144 = arith.mulf %141, %143 : vector<16x256xf32>
    %145 = arith.addf %136, %144 : vector<16x256xf32>
    %c1_i32_34 = arith.constant 1 : i32
    %146 = tpu.dynamic_rotate %116 by %c1_i32_34 dim 1 : vector<16x256xf32>, i32 -> vector<16x256xf32>
    %cst_35 = arith.constant 0.000000e+00 : f32
    %147 = vector.shape_cast %12 : vector<1x256xi1> to vector<1x256xi1>
    %148 = vector.broadcast %147 : vector<1x256xi1> to vector<16x256xi1>
    %149 = vector.broadcast %cst_35 : f32 to vector<16x256xf32>
    %150 = arith.select %148, %146, %149 : vector<16x256xi1>, vector<16x256xf32>
    %151 = vector.extract_strided_slice %117 {offsets = [0, 3], sizes = [16, 1], strides = [1, 1]} : vector<16x9xf32> to vector<16x1xf32>
    %152 = vector.broadcast %151 : vector<16x1xf32> to vector<16x256xf32>
    %153 = arith.mulf %150, %152 : vector<16x256xf32>
    %154 = arith.addf %145, %153 : vector<16x256xf32>
    %155 = vector.extract_strided_slice %117 {offsets = [0, 4], sizes = [16, 1], strides = [1, 1]} : vector<16x9xf32> to vector<16x1xf32>
    %156 = vector.broadcast %155 : vector<16x1xf32> to vector<16x256xf32>
    %157 = arith.mulf %116, %156 : vector<16x256xf32>
    %158 = arith.addf %154, %157 : vector<16x256xf32>
    %c255_i32_36 = arith.constant 255 : i32
    %159 = tpu.dynamic_rotate %116 by %c255_i32_36 dim 1 : vector<16x256xf32>, i32 -> vector<16x256xf32>
    %cst_37 = arith.constant 0.000000e+00 : f32
    %160 = vector.shape_cast %14 : vector<1x256xi1> to vector<1x256xi1>
    %161 = vector.broadcast %160 : vector<1x256xi1> to vector<16x256xi1>
    %162 = vector.broadcast %cst_37 : f32 to vector<16x256xf32>
    %163 = arith.select %161, %159, %162 : vector<16x256xi1>, vector<16x256xf32>
    %164 = vector.extract_strided_slice %117 {offsets = [0, 5], sizes = [16, 1], strides = [1, 1]} : vector<16x9xf32> to vector<16x1xf32>
    %165 = vector.broadcast %164 : vector<16x1xf32> to vector<16x256xf32>
    %166 = arith.mulf %163, %165 : vector<16x256xf32>
    %167 = arith.addf %158, %166 : vector<16x256xf32>
    %c241_i32_38 = arith.constant 241 : i32
    %168 = tpu.dynamic_rotate %116 by %c241_i32_38 dim 1 : vector<16x256xf32>, i32 -> vector<16x256xf32>
    %cst_39 = arith.constant 0.000000e+00 : f32
    %169 = vector.shape_cast %17 : vector<1x256xi1> to vector<1x256xi1>
    %170 = vector.broadcast %169 : vector<1x256xi1> to vector<16x256xi1>
    %171 = vector.broadcast %cst_39 : f32 to vector<16x256xf32>
    %172 = arith.select %170, %168, %171 : vector<16x256xi1>, vector<16x256xf32>
    %173 = vector.extract_strided_slice %117 {offsets = [0, 6], sizes = [16, 1], strides = [1, 1]} : vector<16x9xf32> to vector<16x1xf32>
    %174 = vector.broadcast %173 : vector<16x1xf32> to vector<16x256xf32>
    %175 = arith.mulf %172, %174 : vector<16x256xf32>
    %176 = arith.addf %167, %175 : vector<16x256xf32>
    %c240_i32_40 = arith.constant 240 : i32
    %177 = tpu.dynamic_rotate %116 by %c240_i32_40 dim 1 : vector<16x256xf32>, i32 -> vector<16x256xf32>
    %cst_41 = arith.constant 0.000000e+00 : f32
    %178 = vector.shape_cast %10 : vector<1x256xi1> to vector<1x256xi1>
    %179 = vector.broadcast %178 : vector<1x256xi1> to vector<16x256xi1>
    %180 = vector.broadcast %cst_41 : f32 to vector<16x256xf32>
    %181 = arith.select %179, %177, %180 : vector<16x256xi1>, vector<16x256xf32>
    %182 = vector.extract_strided_slice %117 {offsets = [0, 7], sizes = [16, 1], strides = [1, 1]} : vector<16x9xf32> to vector<16x1xf32>
    %183 = vector.broadcast %182 : vector<16x1xf32> to vector<16x256xf32>
    %184 = arith.mulf %181, %183 : vector<16x256xf32>
    %185 = arith.addf %176, %184 : vector<16x256xf32>
    %c239_i32_42 = arith.constant 239 : i32
    %186 = tpu.dynamic_rotate %116 by %c239_i32_42 dim 1 : vector<16x256xf32>, i32 -> vector<16x256xf32>
    %cst_43 = arith.constant 0.000000e+00 : f32
    %187 = vector.shape_cast %18 : vector<1x256xi1> to vector<1x256xi1>
    %188 = vector.broadcast %187 : vector<1x256xi1> to vector<16x256xi1>
    %189 = vector.broadcast %cst_43 : f32 to vector<16x256xf32>
    %190 = arith.select %188, %186, %189 : vector<16x256xi1>, vector<16x256xf32>
    %191 = vector.extract_strided_slice %117 {offsets = [0, 8], sizes = [16, 1], strides = [1, 1]} : vector<16x9xf32> to vector<16x1xf32>
    %192 = vector.broadcast %191 : vector<16x1xf32> to vector<16x256xf32>
    %193 = arith.mulf %190, %192 : vector<16x256xf32>
    %194 = arith.addf %185, %193 : vector<16x256xf32>
    %c0_44 = arith.constant 0 : index
    %c0_45 = arith.constant 0 : index
    %195 = vector.load %arg7[%c0_44, %c0_45] : memref<16x1xf32, #tpu.memory_space<vmem>>, vector<16x1xf32>
    %196 = vector.broadcast %195 : vector<16x1xf32> to vector<16x256xf32>
    %197 = arith.addf %194, %196 : vector<16x256xf32>
    %198 = arith.negf %197 : vector<16x256xf32>
    %199 = math.exp %198 : vector<16x256xf32>
    %cst_46 = arith.constant 1.000000e+00 : f32
    %200 = vector.broadcast %cst_46 : f32 to vector<16x256xf32>
    %201 = arith.addf %200, %199 : vector<16x256xf32>
    %202 = arith.divf %200, %201 : vector<16x256xf32>
    %203 = arith.mulf %197, %202 : vector<16x256xf32>
    %c0_47 = arith.constant 0 : index
    %c0_48 = arith.constant 0 : index
    %204 = vector.load %arg8[%c0_47, %c0_48] : memref<16x16xf32, #tpu.memory_space<vmem>>, vector<16x16xf32>
    %cst_49 = arith.constant dense<0.000000e+00> : vector<16x256xf32>
    %205 = tpu.matmul %204, %203, %cst_49 {dimension_numbers = #tpu.dot_dimension_numbers<[1], [0], [0], [1], [0, 0, 1, 1], [], []>} : vector<16x16xf32>, vector<16x256xf32>, vector<16x256xf32> -> vector<16x256xf32>
    %c0_50 = arith.constant 0 : index
    %c0_51 = arith.constant 0 : index
    %206 = vector.load %arg9[%c0_50, %c0_51] : memref<16x1xf32, #tpu.memory_space<vmem>>, vector<16x1xf32>
    %207 = vector.broadcast %206 : vector<16x1xf32> to vector<16x256xf32>
    %208 = arith.addf %205, %207 : vector<16x256xf32>
    %209 = arith.negf %208 : vector<16x256xf32>
    %210 = math.exp %209 : vector<16x256xf32>
    %cst_52 = arith.constant 1.000000e+00 : f32
    %211 = vector.broadcast %cst_52 : f32 to vector<16x256xf32>
    %212 = arith.addf %211, %210 : vector<16x256xf32>
    %213 = arith.divf %211, %212 : vector<16x256xf32>
    %214 = arith.mulf %208, %213 : vector<16x256xf32>
    %c0_53 = arith.constant 0 : index
    %c0_54 = arith.constant 0 : index
    %215 = vector.load %arg10[%c0_53, %c0_54] : memref<16x16xf32, #tpu.memory_space<vmem>>, vector<16x16xf32>
    %cst_55 = arith.constant dense<0.000000e+00> : vector<16x256xf32>
    %216 = tpu.matmul %215, %214, %cst_55 {dimension_numbers = #tpu.dot_dimension_numbers<[1], [0], [0], [1], [0, 0, 1, 1], [], []>} : vector<16x16xf32>, vector<16x256xf32>, vector<16x256xf32> -> vector<16x256xf32>
    %c0_56 = arith.constant 0 : index
    %c0_57 = arith.constant 0 : index
    %217 = vector.load %arg11[%c0_56, %c0_57] : memref<16x1xf32, #tpu.memory_space<vmem>>, vector<16x1xf32>
    %218 = vector.broadcast %217 : vector<16x1xf32> to vector<16x256xf32>
    %219 = arith.addf %216, %218 : vector<16x256xf32>
    %c0_58 = arith.constant 0 : index
    %c0_59 = arith.constant 0 : index
    %c0_60 = arith.constant 0 : index
    %220 = vector.load %arg12[%c0_58, %c0_59, %c0_60] : memref<1x16x256xf32, #tpu.memory_space<vmem>>, vector<1x16x256xf32>
    %221 = vector.shape_cast %220 : vector<1x16x256xf32> to vector<16x256xf32>
    %222 = vector.shape_cast %219 : vector<16x256xf32> to vector<1x16x256xf32>
    tpu.vector_store %arg12[%c0_58, %c0_59, %c0_60], %222 {strides = array<i32>} : memref<1x16x256xf32, #tpu.memory_space<vmem>>, vector<1x16x256xf32>,
    return
  }
  func.func @transform_0(%arg0: i32) -> (i32, i32, i32) {
    %c0_i32 = arith.constant 0 : i32
    %c0_i32_0 = arith.constant 0 : i32
    %c0_i32_1 = arith.constant 0 : i32
    return %arg0, %c0_i32, %c0_i32_0 : i32, i32, i32
  }
  func.func @transform_1(%arg0: i32) -> (i32, i32) {
    %c0_i32 = arith.constant 0 : i32
    %c0_i32_0 = arith.constant 0 : i32
    %c0_i32_1 = arith.constant 0 : i32
    return %c0_i32, %c0_i32_0 : i32, i32
  }
  func.func @transform_2(%arg0: i32) -> (i32, i32) {
    %c0_i32 = arith.constant 0 : i32
    %c0_i32_0 = arith.constant 0 : i32
    %c0_i32_1 = arith.constant 0 : i32
    return %c0_i32, %c0_i32_0 : i32, i32
  }
  func.func @transform_3(%arg0: i32) -> (i32, i32) {
    %c0_i32 = arith.constant 0 : i32
    %c0_i32_0 = arith.constant 0 : i32
    %c0_i32_1 = arith.constant 0 : i32
    return %c0_i32, %c0_i32_0 : i32, i32
  }
  func.func @transform_4(%arg0: i32) -> (i32, i32) {
    %c0_i32 = arith.constant 0 : i32
    %c0_i32_0 = arith.constant 0 : i32
    %c0_i32_1 = arith.constant 0 : i32
    return %c0_i32, %c0_i32_0 : i32, i32
  }
  func.func @transform_5(%arg0: i32) -> (i32, i32) {
    %c0_i32 = arith.constant 0 : i32
    %c0_i32_0 = arith.constant 0 : i32
    %c0_i32_1 = arith.constant 0 : i32
    return %c0_i32, %c0_i32_0 : i32, i32
  }
  func.func @transform_6(%arg0: i32) -> (i32, i32) {
    %c0_i32 = arith.constant 0 : i32
    %c0_i32_0 = arith.constant 0 : i32
    %c0_i32_1 = arith.constant 0 : i32
    return %c0_i32, %c0_i32_0 : i32, i32
  }
  func.func @transform_7(%arg0: i32) -> (i32, i32) {
    %c0_i32 = arith.constant 0 : i32
    %c0_i32_0 = arith.constant 0 : i32
    %c0_i32_1 = arith.constant 0 : i32
    return %c0_i32, %c0_i32_0 : i32, i32
  }
  func.func @transform_8(%arg0: i32) -> (i32, i32) {
    %c0_i32 = arith.constant 0 : i32
    %c0_i32_0 = arith.constant 0 : i32
    %c0_i32_1 = arith.constant 0 : i32
    return %c0_i32, %c0_i32_0 : i32, i32
  }
  func.func @transform_9(%arg0: i32) -> (i32, i32) {
    %c0_i32 = arith.constant 0 : i32
    %c0_i32_0 = arith.constant 0 : i32
    %c0_i32_1 = arith.constant 0 : i32
    return %c0_i32, %c0_i32_0 : i32, i32
  }
  func.func @transform_10(%arg0: i32) -> (i32, i32) {
    %c0_i32 = arith.constant 0 : i32
    %c0_i32_0 = arith.constant 0 : i32
    %c0_i32_1 = arith.constant 0 : i32
    return %c0_i32, %c0_i32_0 : i32, i32
  }
  func.func @transform_11(%arg0: i32) -> (i32, i32, i32) {
    %c0_i32 = arith.constant 0 : i32
    %c0_i32_0 = arith.constant 0 : i32
    %c0_i32_1 = arith.constant 0 : i32
    return %arg0, %c0_i32, %c0_i32_0 : i32, i32, i32
  }
}

</mosaic_0001>

<llo_original>
// kernel: tpu_custom_call.1
$region0: #{tpu_custom_call.1}
  #allocation0 [shape = 'u32[]', space=smem, size = 0x4, offset = 0x4, fixed_abs, tag = 'smem constant byte address 0x4 - core index']
  #allocation1 [shape = 'u32[144,128]{1,0:T(1,128)}', space=vmem, size = 0x12000, scoped, tag = 'internal scratch']
  %s0 = inlined_call_operand.vmem [shape: f32[2,8,256], index: 0, kind: input, shape index: {}]
  %s1 = inlined_call_operand.vmem [shape: f32[8,9], index: 1, kind: input, shape index: {}]
  %s2 = inlined_call_operand.vmem [shape: f32[8,1], index: 2, kind: input, shape index: {}]
  %s3 = inlined_call_operand.vmem [shape: f32[16,8], index: 3, kind: input, shape index: {}]
  %s4 = inlined_call_operand.vmem [shape: f32[16,1], index: 4, kind: input, shape index: {}]
  %s5 = inlined_call_operand.vmem [shape: f32[16,9], index: 5, kind: input, shape index: {}]
  %s6 = inlined_call_operand.vmem [shape: f32[16,1], index: 6, kind: input, shape index: {}]
  %s7 = inlined_call_operand.vmem [shape: f32[16,16], index: 7, kind: input, shape index: {}]
  %s8 = inlined_call_operand.vmem [shape: f32[16,1], index: 8, kind: input, shape index: {}]
  %s9 = inlined_call_operand.vmem [shape: f32[16,16], index: 9, kind: input, shape index: {}]
  %s10 = inlined_call_operand.vmem [shape: f32[16,1], index: 10, kind: input, shape index: {}]
  %s11 = inlined_call_operand.hbm [shape: f32[2,16,256], index: 11, kind: output, shape index: {}]
  %s12 = sld [smem:[#allocation0]]
  $region77: #{tpu_custom_call.1} parent=0
    _
  %s14 = ssub.s32 1, %s12
  %s15 = scalar_select 0, %s14, %s12
  $region1: #{tpu_custom_call.1} parent=0
    #allocation2 [shape = 'u8[32768]{0}', space=vmem, size = 0x8000, scoped, tag = 'output window, operand 0']
    #allocation3 [shape = 's32[2]{0}', space=sflag, size = 0x8, scoped, tag = 'scoped memory for tpu_custom_call.1']
    %16 = vsyncpa [#allocation3], 0
    %s17 = scalar_lea.sflag [#allocation3], 1
    %18 = vsyncpa %s17, 0
    loop: start=0, step=1, limit=4
    $region2: #{tpu_custom_call.1} parent=1 // loop_pre_header
      _
    $region3: #{tpu_custom_call.1} parent=1 // loop_header
      %s20 = sphi 0, %s24
      %p21 = scmp.ge.s32.totalorder %s20, 4
      %s30 = sphi 0, %s32
      %s33 = sphi 0, %s30
      %s34 = sphi 0, %s33
      %s50 = sphi 0, %s34
      %s54 = sphi 0, %s54
      %s56 = sphi 0, %s54
      %s57 = sphi 0, %s56
      %s71 = sphi 0, %s57
      %s75 = sphi 0, %s75
      %s77 = sphi 0, %s75
      %s78 = sphi 0, %s77
      %s92 = sphi 0, %s78
      %s96 = sphi 0, %s96
      %s98 = sphi 0, %s96
      %s99 = sphi 0, %s98
      %s113 = sphi 0, %s99
      %s117 = sphi 0, %s117
      %s119 = sphi 0, %s117
      %s120 = sphi 0, %s119
      %s134 = sphi 0, %s120
      %s138 = sphi 0, %s138
      %s140 = sphi 0, %s138
      %s141 = sphi 0, %s140
      %s155 = sphi 0, %s141
      %s159 = sphi 0, %s159
      %s161 = sphi 0, %s159
      %s162 = sphi 0, %s161
      %s176 = sphi 0, %s162
      %s180 = sphi 0, %s180
      %s182 = sphi 0, %s180
      %s183 = sphi 0, %s182
      %s197 = sphi 0, %s183
      %s201 = sphi 0, %s201
      %s203 = sphi 0, %s201
      %s204 = sphi 0, %s203
      %s218 = sphi 0, %s204
      %s222 = sphi 0, %s222
      %s224 = sphi 0, %s222
      %s225 = sphi 0, %s224
      %s239 = sphi 0, %s225
      %s243 = sphi 0, %s243
      %s245 = sphi 0, %s243
      %s246 = sphi 0, %s245
      %s260 = sphi 0, %s246
      %s266 = sphi 0, %s268
      %s269 = sphi 0, %s266
      %s270 = sphi 0, %s269
      %s286 = sphi 0, %s270
    $region4: #{tpu_custom_call.1} parent=1 // loop_header_branch
      %23 = sbr.rel (%p21) target = $region8
    $region5: #{tpu_custom_call.1} parent=1 // loop_body
      %s25 = ssub.s32 %s20, 1
      %s26 = ssub.s32 %s20, 2
      %s27 = sadd.s32 %s20, 1
      %s28 = ssub.s32 %s20, %s27
      %p29 = scmp.eq.s32.totalorder %s28, 0
      %s31 = sadd.s32 %s30, 1
      %s32 = scalar_select %p29, %s30, %s31
      %p35 = pneg %p29
      %p36 = scmp.eq.s32.totalorder %s20, 1
      %p37 = por %p35, %p36
      %p38 = scmp.ne.s32.totalorder %s30, %s33
      %p39 = scmp.eq.s32.totalorder %s20, 0
      %p40 = por %p38, %p39
      %p41 = scmp.ne.s32.totalorder %s30, %s33
      %p42 = scmp.eq.s32.totalorder %s25, 1
      %p43 = por %p41, %p42
      %p44 = scmp.ne.s32.totalorder %s33, %s34
      %p45 = scmp.eq.s32.totalorder %s25, 0
      %p46 = por %p44, %p45
      %p47 = scmp.ne.s32.totalorder %s33, %s34
      %p48 = scmp.eq.s32.totalorder %s26, 1
      %p49 = por %p47, %p48
      %p51 = scmp.ne.s32.totalorder %s34, %s50
      %p52 = scmp.eq.s32.totalorder %s26, 0
      %p53 = por %p51, %p52
      %s55 = sadd.s32 %s54, 1
      %p58 = scmp.eq.s32.totalorder %s20, 1
      %p59 = scmp.ne.s32.totalorder %s54, %s56
      %p60 = scmp.eq.s32.totalorder %s20, 0
      %p61 = por %p59, %p60
      %p62 = scmp.ne.s32.totalorder %s54, %s56
      %p63 = scmp.eq.s32.totalorder %s25, 1
      %p64 = por %p62, %p63
      %p65 = scmp.ne.s32.totalorder %s56, %s57
      %p66 = scmp.eq.s32.totalorder %s25, 0
      %p67 = por %p65, %p66
      %p68 = scmp.ne.s32.totalorder %s56, %s57
      %p69 = scmp.eq.s32.totalorder %s26, 1
      %p70 = por %p68, %p69
      %p72 = scmp.ne.s32.totalorder %s57, %s71
      %p73 = scmp.eq.s32.totalorder %s26, 0
      %p74 = por %p72, %p73
      %s76 = sadd.s32 %s75, 1
      %p79 = scmp.eq.s32.totalorder %s20, 1
      %p80 = scmp.ne.s32.totalorder %s75, %s77
      %p81 = scmp.eq.s32.totalorder %s20, 0
      %p82 = por %p80, %p81
      %p83 = scmp.ne.s32.totalorder %s75, %s77
      %p84 = scmp.eq.s32.totalorder %s25, 1
      %p85 = por %p83, %p84
      %p86 = scmp.ne.s32.totalorder %s77, %s78
      %p87 = scmp.eq.s32.totalorder %s25, 0
      %p88 = por %p86, %p87
      %p89 = scmp.ne.s32.totalorder %s77, %s78
      %p90 = scmp.eq.s32.totalorder %s26, 1
      %p91 = por %p89, %p90
      %p93 = scmp.ne.s32.totalorder %s78, %s92
      %p94 = scmp.eq.s32.totalorder %s26, 0
      %p95 = por %p93, %p94
      %s97 = sadd.s32 %s96, 1
      %p100 = scmp.eq.s32.totalorder %s20, 1
      %p101 = scmp.ne.s32.totalorder %s96, %s98
      %p102 = scmp.eq.s32.totalorder %s20, 0
      %p103 = por %p101, %p102
      %p104 = scmp.ne.s32.totalorder %s96, %s98
      %p105 = scmp.eq.s32.totalorder %s25, 1
      %p106 = por %p104, %p105
      %p107 = scmp.ne.s32.totalorder %s98, %s99
      %p108 = scmp.eq.s32.totalorder %s25, 0
      %p109 = por %p107, %p108
      %p110 = scmp.ne.s32.totalorder %s98, %s99
      %p111 = scmp.eq.s32.totalorder %s26, 1
      %p112 = por %p110, %p111
      %p114 = scmp.ne.s32.totalorder %s99, %s113
      %p115 = scmp.eq.s32.totalorder %s26, 0
      %p116 = por %p114, %p115
      %s118 = sadd.s32 %s117, 1
      %p121 = scmp.eq.s32.totalorder %s20, 1
      %p122 = scmp.ne.s32.totalorder %s117, %s119
      %p123 = scmp.eq.s32.totalorder %s20, 0
      %p124 = por %p122, %p123
      %p125 = scmp.ne.s32.totalorder %s117, %s119
      %p126 = scmp.eq.s32.totalorder %s25, 1
      %p127 = por %p125, %p126
      %p128 = scmp.ne.s32.totalorder %s119, %s120
      %p129 = scmp.eq.s32.totalorder %s25, 0
      %p130 = por %p128, %p129
      %p131 = scmp.ne.s32.totalorder %s119, %s120
      %p132 = scmp.eq.s32.totalorder %s26, 1
      %p133 = por %p131, %p132
      %p135 = scmp.ne.s32.totalorder %s120, %s134
      %p136 = scmp.eq.s32.totalorder %s26, 0
      %p137 = por %p135, %p136
      %s139 = sadd.s32 %s138, 1
      %p142 = scmp.eq.s32.totalorder %s20, 1
      %p143 = scmp.ne.s32.totalorder %s138, %s140
      %p144 = scmp.eq.s32.totalorder %s20, 0
      %p145 = por %p143, %p144
      %p146 = scmp.ne.s32.totalorder %s138, %s140
      %p147 = scmp.eq.s32.totalorder %s25, 1
      %p148 = por %p146, %p147
      %p149 = scmp.ne.s32.totalorder %s140, %s141
      %p150 = scmp.eq.s32.totalorder %s25, 0
      %p151 = por %p149, %p150
      %p152 = scmp.ne.s32.totalorder %s140, %s141
      %p153 = scmp.eq.s32.totalorder %s26, 1
      %p154 = por %p152, %p153
      %p156 = scmp.ne.s32.totalorder %s141, %s155
      %p157 = scmp.eq.s32.totalorder %s26, 0
      %p158 = por %p156, %p157
      %s160 = sadd.s32 %s159, 1
      %p163 = scmp.eq.s32.totalorder %s20, 1
      %p164 = scmp.ne.s32.totalorder %s159, %s161
      %p165 = scmp.eq.s32.totalorder %s20, 0
      %p166 = por %p164, %p165
      %p167 = scmp.ne.s32.totalorder %s159, %s161
      %p168 = scmp.eq.s32.totalorder %s25, 1
      %p169 = por %p167, %p168
      %p170 = scmp.ne.s32.totalorder %s161, %s162
      %p171 = scmp.eq.s32.totalorder %s25, 0
      %p172 = por %p170, %p171
      %p173 = scmp.ne.s32.totalorder %s161, %s162
      %p174 = scmp.eq.s32.totalorder %s26, 1
      %p175 = por %p173, %p174
      %p177 = scmp.ne.s32.totalorder %s162, %s176
      %p178 = scmp.eq.s32.totalorder %s26, 0
      %p179 = por %p177, %p178
      %s181 = sadd.s32 %s180, 1
      %p184 = scmp.eq.s32.totalorder %s20, 1
      %p185 = scmp.ne.s32.totalorder %s180, %s182
      %p186 = scmp.eq.s32.totalorder %s20, 0
      %p187 = por %p185, %p186
      %p188 = scmp.ne.s32.totalorder %s180, %s182
      %p189 = scmp.eq.s32.totalorder %s25, 1
      %p190 = por %p188, %p189
      %p191 = scmp.ne.s32.totalorder %s182, %s183
      %p192 = scmp.eq.s32.totalorder %s25, 0
      %p193 = por %p191, %p192
      %p194 = scmp.ne.s32.totalorder %s182, %s183
      %p195 = scmp.eq.s32.totalorder %s26, 1
      %p196 = por %p194, %p195
      %p198 = scmp.ne.s32.totalorder %s183, %s197
      %p199 = scmp.eq.s32.totalorder %s26, 0
      %p200 = por %p198, %p199
      %s202 = sadd.s32 %s201, 1
      %p205 = scmp.eq.s32.totalorder %s20, 1
      %p206 = scmp.ne.s32.totalorder %s201, %s203
      %p207 = scmp.eq.s32.totalorder %s20, 0
      %p208 = por %p206, %p207
      %p209 = scmp.ne.s32.totalorder %s201, %s203
      %p210 = scmp.eq.s32.totalorder %s25, 1
      %p211 = por %p209, %p210
      %p212 = scmp.ne.s32.totalorder %s203, %s204
      %p213 = scmp.eq.s32.totalorder %s25, 0
      %p214 = por %p212, %p213
      %p215 = scmp.ne.s32.totalorder %s203, %s204
      %p216 = scmp.eq.s32.totalorder %s26, 1
      %p217 = por %p215, %p216
      %p219 = scmp.ne.s32.totalorder %s204, %s218
      %p220 = scmp.eq.s32.totalorder %s26, 0
      %p221 = por %p219, %p220
      %s223 = sadd.s32 %s222, 1
      %p226 = scmp.eq.s32.totalorder %s20, 1
      %p227 = scmp.ne.s32.totalorder %s222, %s224
      %p228 = scmp.eq.s32.totalorder %s20, 0
      %p229 = por %p227, %p228
      %p230 = scmp.ne.s32.totalorder %s222, %s224
      %p231 = scmp.eq.s32.totalorder %s25, 1
      %p232 = por %p230, %p231
      %p233 = scmp.ne.s32.totalorder %s224, %s225
      %p234 = scmp.eq.s32.totalorder %s25, 0
      %p235 = por %p233, %p234
      %p236 = scmp.ne.s32.totalorder %s224, %s225
      %p237 = scmp.eq.s32.totalorder %s26, 1
      %p238 = por %p236, %p237
      %p240 = scmp.ne.s32.totalorder %s225, %s239
      %p241 = scmp.eq.s32.totalorder %s26, 0
      %p242 = por %p240, %p241
      %s244 = sadd.s32 %s243, 1
      %p247 = scmp.eq.s32.totalorder %s20, 1
      %p248 = scmp.ne.s32.totalorder %s243, %s245
      %p249 = scmp.eq.s32.totalorder %s20, 0
      %p250 = por %p248, %p249
      %p251 = scmp.ne.s32.totalorder %s243, %s245
      %p252 = scmp.eq.s32.totalorder %s25, 1
      %p253 = por %p251, %p252
      %p254 = scmp.ne.s32.totalorder %s245, %s246
      %p255 = scmp.eq.s32.totalorder %s25, 0
      %p256 = por %p254, %p255
      %p257 = scmp.ne.s32.totalorder %s245, %s246
      %p258 = scmp.eq.s32.totalorder %s26, 1
      %p259 = por %p257, %p258
      %p261 = scmp.ne.s32.totalorder %s246, %s260
      %p262 = scmp.eq.s32.totalorder %s26, 0
      %p263 = por %p261, %p262
      %s264 = ssub.s32 %s20, %s27
      %p265 = scmp.eq.s32.totalorder %s264, 0
      %s267 = sadd.s32 %s266, 1
      %s268 = scalar_select %p265, %s266, %s267
      %p271 = pneg %p265
      %p272 = scmp.eq.s32.totalorder %s20, 1
      %p273 = por %p271, %p272
      %p274 = scmp.ne.s32.totalorder %s266, %s269
      %p275 = scmp.eq.s32.totalorder %s20, 0
      %p276 = por %p274, %p275
      %p277 = scmp.ne.s32.totalorder %s266, %s269
      %p278 = scmp.eq.s32.totalorder %s25, 1
      %p279 = por %p277, %p278
      %p280 = scmp.ne.s32.totalorder %s269, %s270
      %p281 = scmp.eq.s32.totalorder %s25, 0
      %p282 = por %p280, %p281
      %p283 = scmp.ne.s32.totalorder %s269, %s270
      %p284 = scmp.eq.s32.totalorder %s26, 1
      %p285 = por %p283, %p284
      %p287 = scmp.ne.s32.totalorder %s270, %s286
      %p288 = scmp.eq.s32.totalorder %s26, 0
      %p289 = por %p287, %p288
      %p290 = scmp.le.s32.totalorder 1, %s20
      %p291 = scmp.lt.s32.totalorder %s20, 3
      %p292 = pnand %p290, %p291
      %p293 = pneg %p292
      // Predicated region
      $region9: #{tpu_custom_call.1} parent=5 // pred_check
        _
      $region10: #{tpu_custom_call.1} parent=5 // pred_check_branch
        %295 = sbr.rel (%p292) target = $region12
      $region11: #{tpu_custom_call.1} parent=5 // pred_region
        %s296 = ssub.s32 %s20, 1
        // Predicated region
        $region13: #{tpu_custom_call.1} parent=11 // pred_check
          %p297 = pneg %p67
        $region14: #{tpu_custom_call.1} parent=11 // pred_check_branch
          %299 = sbr.rel (%p297) target = $region16
        $region15: #{tpu_custom_call.1} parent=11 // pred_region
          _
        $region16: #{tpu_custom_call.1} parent=11 // pred_fallthru
          _
        // Predicated region
        $region17: #{tpu_custom_call.1} parent=11 // pred_check
          %p300 = pneg %p88
        $region18: #{tpu_custom_call.1} parent=11 // pred_check_branch
          %302 = sbr.rel (%p300) target = $region20
        $region19: #{tpu_custom_call.1} parent=11 // pred_region
          _
        $region20: #{tpu_custom_call.1} parent=11 // pred_fallthru
          _
        // Predicated region
        $region21: #{tpu_custom_call.1} parent=11 // pred_check
          %p303 = pneg %p109
        $region22: #{tpu_custom_call.1} parent=11 // pred_check_branch
          %305 = sbr.rel (%p303) target = $region24
        $region23: #{tpu_custom_call.1} parent=11 // pred_region
          _
        $region24: #{tpu_custom_call.1} parent=11 // pred_fallthru
          _
        // Predicated region
        $region25: #{tpu_custom_call.1} parent=11 // pred_check
          %p306 = pneg %p130
        $region26: #{tpu_custom_call.1} parent=11 // pred_check_branch
          %308 = sbr.rel (%p306) target = $region28
        $region27: #{tpu_custom_call.1} parent=11 // pred_region
          _
        $region28: #{tpu_custom_call.1} parent=11 // pred_fallthru
          _
        // Predicated region
        $region29: #{tpu_custom_call.1} parent=11 // pred_check
          %p309 = pneg %p151
        $region30: #{tpu_custom_call.1} parent=11 // pred_check_branch
          %311 = sbr.rel (%p309) target = $region32
        $region31: #{tpu_custom_call.1} parent=11 // pred_region
          _
        $region32: #{tpu_custom_call.1} parent=11 // pred_fallthru
          _
        // Predicated region
        $region33: #{tpu_custom_call.1} parent=11 // pred_check
          %p312 = pneg %p172
        $region34: #{tpu_custom_call.1} parent=11 // pred_check_branch
          %314 = sbr.rel (%p312) target = $region36
        $region35: #{tpu_custom_call.1} parent=11 // pred_region
          _
        $region36: #{tpu_custom_call.1} parent=11 // pred_fallthru
          _
        // Predicated region
        $region37: #{tpu_custom_call.1} parent=11 // pred_check
          %p315 = pneg %p193
        $region38: #{tpu_custom_call.1} parent=11 // pred_check_branch
          %317 = sbr.rel (%p315) target = $region40
        $region39: #{tpu_custom_call.1} parent=11 // pred_region
          _
        $region40: #{tpu_custom_call.1} parent=11 // pred_fallthru
          _
        // Predicated region
        $region41: #{tpu_custom_call.1} parent=11 // pred_check
          %p318 = pneg %p214
        $region42: #{tpu_custom_call.1} parent=11 // pred_check_branch
          %320 = sbr.rel (%p318) target = $region44
        $region43: #{tpu_custom_call.1} parent=11 // pred_region
          _
        $region44: #{tpu_custom_call.1} parent=11 // pred_fallthru
          _
        // Predicated region
        $region45: #{tpu_custom_call.1} parent=11 // pred_check
          %p321 = pneg %p235
        $region46: #{tpu_custom_call.1} parent=11 // pred_check_branch
          %323 = sbr.rel (%p321) target = $region48
        $region47: #{tpu_custom_call.1} parent=11 // pred_region
          _
        $region48: #{tpu_custom_call.1} parent=11 // pred_fallthru
          _
        // Predicated region
        $region49: #{tpu_custom_call.1} parent=11 // pred_check
          %p324 = pneg %p256
        $region50: #{tpu_custom_call.1} parent=11 // pred_check_branch
          %326 = sbr.rel (%p324) target = $region52
        $region51: #{tpu_custom_call.1} parent=11 // pred_region
          _
        $region52: #{tpu_custom_call.1} parent=11 // pred_fallthru
          _
      $region12: #{tpu_custom_call.1} parent=5 // pred_fallthru
        _
      %p327 = scmp.lt.s32.totalorder %s20, 2
      // Predicated region
      $region53: #{tpu_custom_call.1} parent=5 // pred_check
        %p328 = pneg %p327
      $region54: #{tpu_custom_call.1} parent=5 // pred_check_branch
        %330 = sbr.rel (%p328) target = $region56
      $region55: #{tpu_custom_call.1} parent=5 // pred_region
        // Predicated region
        $region57: #{tpu_custom_call.1} parent=55 // pred_check
          %p331 = pneg %p40
        $region58: #{tpu_custom_call.1} parent=55 // pred_check_branch
          %333 = sbr.rel (%p331) target = $region60
        $region59: #{tpu_custom_call.1} parent=55 // pred_region
          %p334 = scmp.lt.s32.totalorder %s20, 1
          %s335 = scalar_select %p334, %s20, 1
          %s336 = smul.addr %s335, 2
          %s337 = smul.addr %s336, 8
          %s338 = scalar_lea.vmem %s0, %s337
        $region60: #{tpu_custom_call.1} parent=55 // pred_fallthru
          _
      $region56: #{tpu_custom_call.1} parent=5 // pred_fallthru
        _
      %p339 = scmp.le.s32.totalorder 1, %s20
      %p340 = scmp.lt.s32.totalorder %s20, 3
      %p341 = pnand %p339, %p340
      %p342 = pneg %p341
      // Predicated region
      $region61: #{tpu_custom_call.1} parent=5 // pred_check
        _
      $region62: #{tpu_custom_call.1} parent=5 // pred_check_branch
        %344 = sbr.rel (%p341) target = $region64
      $region63: #{tpu_custom_call.1} parent=5 // pred_region
        %s345 = ssub.s32 %s20, 1
        %p346 = scmp.lt.s32.totalorder %s25, 1
        %s347 = scalar_select %p346, %s25, 1
        %s348 = smul.addr %s347, 2
        %s349 = smul.addr %s348, 8
        %s350 = scalar_lea.vmem %s0, %s349
        %p351 = pneg %p46
        %p352 = pneg %p43
        %p353 = pneg %p67
        %p354 = pneg %p64
        %p355 = pneg %p88
        %p356 = pneg %p85
        %p357 = pneg %p109
        %p358 = pneg %p106
        %p359 = pneg %p130
        %p360 = pneg %p127
        %p361 = pneg %p151
        %p362 = pneg %p148
        %p363 = pneg %p172
        %p364 = pneg %p169
        %p365 = pneg %p193
        %p366 = pneg %p190
        %p367 = pneg %p214
        %p368 = pneg %p211
        %p369 = pneg %p235
        %p370 = pneg %p232
        %p371 = pneg %p256
        %p372 = pneg %p253
        %p373 = pneg %p282
        %p374 = pneg %p279
        %s375 = sand.u32 %s269, 1
        %s376 = scalar_lea.sflag [#allocation3], %s375
        %s377 = sand.u32 %s269, 1
        %s378 = smul.addr %s377, 32
        %s379 = scalar_lea.vmem [#allocation2], %s378
        %p380 = scmp.lt.s32.totalorder %s25, 1
        %s381 = scalar_select %p380, %s25, 1
        %s382 = smul.addr %s381, 2
        %s383 = smul.addr %s382, 8
        %s384 = scalar_lea.vmem %s0, %s383
        %v385 = vld [vmem:[%s384] sm:$0xff]
        %v386 = vld [vmem:[%s384 + $0x8] sm:$0xff]
        %v387 = vlaneseq
        %v388 = vand.u32 %v387, 127
        %v389 = vadd.s32 %v388, 128
        %v390 = vand.u32 %v388, 15
        %v391 = vand.u32 %v389, 15
        %v392 = vshra.s32 %v388, 4
        %v393 = vshra.s32 %v389, 4
        %vm394 = vcmp.ge.s32.totalorder %v392, 1
        %vm395 = vcmp.ge.s32.totalorder %v393, 1
        %vm396 = vcmp.le.s32.totalorder %v392, 14
        %vm397 = vcmp.le.s32.totalorder %v393, 14
        %vm398 = vcmp.ge.s32.totalorder %v390, 1
        %vm399 = vcmp.ge.s32.totalorder %v391, 1
        %vm400 = vcmp.le.s32.totalorder %v390, 14
        %vm401 = vcmp.le.s32.totalorder %v391, 14
        %vm402 = vmand %vm394, %vm398
        %vm403 = vmand %vm395, %vm399
        %vm404 = vmand %vm394, %vm400
        %vm405 = vmand %vm395, %vm401
        %vm406 = vmand %vm396, %vm398
        %vm407 = vmand %vm397, %vm399
        %vm408 = vmand %vm396, %vm400
        %vm409 = vmand %vm397, %vm401
        %v410 = vld [vmem:[%s1] sm:$0xff]
        %411 = vrot.lane.b32.xlu0 %v385, 17
        %v412 = vpop.permute.xlu0 %411
        %413 = vrot.lane.b32.xlu0 %v386, 17
        %v414 = vpop.permute.xlu0 %413
        %vm415 = vcmp.lt.s32.totalorder %v388, 17
        %v416 = vsel %vm415, %v412, %v414
        %v417 = vsel %vm415, %v414, %v412
        %v418 = vsel %vm402, 1, 0
        %v419 = vsel %vm403, 1, 0
        %vm420 = vcmp.eq.s32.totalorder %v418, 1
        %vm421 = vcmp.eq.s32.totalorder %v419, 1
        %v422 = vsel %vm420, %v417, 0.0
        %v423 = vsel %vm421, %v416, 0.0
        %425 = vset.pattern.permute.xlu0 0
        %426 = vperm.xlu0 %425, %v410
        %v427 = vpop.permute.xlu0 %426
        %v429 = vmul.f32 %v422, %v427
        %v430 = vmul.f32 %v423, %v427
        %v431 = vadd.f32 %v429, 0.0
        %v432 = vadd.f32 %v430, 0.0
        %433 = vrot.lane.b32.xlu0 %v385, 16
        %v434 = vpop.permute.xlu0 %433
        %435 = vrot.lane.b32.xlu0 %v386, 16
        %v436 = vpop.permute.xlu0 %435
        %vm437 = vcmp.lt.s32.totalorder %v388, 16
        %v438 = vsel %vm437, %v434, %v436
        %v439 = vsel %vm437, %v436, %v434
        %v440 = vsel %vm394, 1, 0
        %v441 = vsel %vm395, 1, 0
        %vm442 = vcmp.eq.s32.totalorder %v440, 1
        %vm443 = vcmp.eq.s32.totalorder %v441, 1
        %v444 = vsel %vm442, %v439, 0.0
        %v445 = vsel %vm443, %v438, 0.0
        %446 = vset.pattern.permute.xlu0 1
        %447 = vperm.xlu0 %446, %v410
        %v448 = vpop.permute.xlu0 %447
        %v450 = vmul.f32 %v444, %v448
        %v451 = vmul.f32 %v445, %v448
        %v452 = vadd.f32 %v431, %v450
        %v453 = vadd.f32 %v432, %v451
        %454 = vrot.lane.b32.xlu0 %v385, 15
        %v455 = vpop.permute.xlu0 %454
        %456 = vrot.lane.b32.xlu0 %v386, 15
        %v457 = vpop.permute.xlu0 %456
        %vm458 = vcmp.lt.s32.totalorder %v388, 15
        %v459 = vsel %vm458, %v455, %v457
        %v460 = vsel %vm458, %v457, %v455
        %v461 = vsel %vm404, 1, 0
        %v462 = vsel %vm405, 1, 0
        %vm463 = vcmp.eq.s32.totalorder %v461, 1
        %vm464 = vcmp.eq.s32.totalorder %v462, 1
        %v465 = vsel %vm463, %v460, 0.0
        %v466 = vsel %vm464, %v459, 0.0
        %467 = vset.pattern.permute.xlu0 2
        %468 = vperm.xlu0 %467, %v410
        %v469 = vpop.permute.xlu0 %468
        %v471 = vmul.f32 %v465, %v469
        %v472 = vmul.f32 %v466, %v469
        %v473 = vadd.f32 %v452, %v471
        %v474 = vadd.f32 %v453, %v472
        %475 = vrot.lane.b32.xlu0 %v385, 1
        %v476 = vpop.permute.xlu0 %475
        %477 = vrot.lane.b32.xlu0 %v386, 1
        %v478 = vpop.permute.xlu0 %477
        %vm479 = vcmp.lt.s32.totalorder %v388, 1
        %v480 = vsel %vm479, %v476, %v478
        %v481 = vsel %vm479, %v478, %v476
        %v482 = vsel %vm398, 1, 0
        %v483 = vsel %vm399, 1, 0
        %vm484 = vcmp.eq.s32.totalorder %v482, 1
        %vm485 = vcmp.eq.s32.totalorder %v483, 1
        %v486 = vsel %vm484, %v481, 0.0
        %v487 = vsel %vm485, %v480, 0.0
        %488 = vset.pattern.permute.xlu0 3
        %489 = vperm.xlu0 %488, %v410
        %v490 = vpop.permute.xlu0 %489
        %v492 = vmul.f32 %v486, %v490
        %v493 = vmul.f32 %v487, %v490
        %v494 = vadd.f32 %v473, %v492
        %v495 = vadd.f32 %v474, %v493
        %496 = vset.pattern.permute.xlu0 4
        %497 = vperm.xlu0 %496, %v410
        %v498 = vpop.permute.xlu0 %497
        %v500 = vmul.f32 %v385, %v498
        %v501 = vmul.f32 %v386, %v498
        %v502 = vadd.f32 %v494, %v500
        %v503 = vadd.f32 %v495, %v501
        %504 = vrot.lane.b32.xlu0 %v385, 127
        %v505 = vpop.permute.xlu0 %504
        %506 = vrot.lane.b32.xlu0 %v386, 127
        %v507 = vpop.permute.xlu0 %506
        %vm508 = vcmp.lt.s32.totalorder %v388, 127
        %v509 = vsel %vm508, %v505, %v507
        %v510 = vsel %vm508, %v507, %v505
        %v511 = vsel %vm400, 1, 0
        %v512 = vsel %vm401, 1, 0
        %vm513 = vcmp.eq.s32.totalorder %v511, 1
        %vm514 = vcmp.eq.s32.totalorder %v512, 1
        %v515 = vsel %vm513, %v509, 0.0
        %v516 = vsel %vm514, %v510, 0.0
        %517 = vset.pattern.permute.xlu0 5
        %518 = vperm.xlu0 %517, %v410
        %v519 = vpop.permute.xlu0 %518
        %v521 = vmul.f32 %v515, %v519
        %v522 = vmul.f32 %v516, %v519
        %v523 = vadd.f32 %v502, %v521
        %v524 = vadd.f32 %v503, %v522
        %525 = vrot.lane.b32.xlu0 %v385, 113
        %v526 = vpop.permute.xlu0 %525
        %527 = vrot.lane.b32.xlu0 %v386, 113
        %v528 = vpop.permute.xlu0 %527
        %vm529 = vcmp.lt.s32.totalorder %v388, 113
        %v530 = vsel %vm529, %v526, %v528
        %v531 = vsel %vm529, %v528, %v526
        %v532 = vsel %vm406, 1, 0
        %v533 = vsel %vm407, 1, 0
        %vm534 = vcmp.eq.s32.totalorder %v532, 1
        %vm535 = vcmp.eq.s32.totalorder %v533, 1
        %v536 = vsel %vm534, %v530, 0.0
        %v537 = vsel %vm535, %v531, 0.0
        %538 = vset.pattern.permute.xlu0 6
        %539 = vperm.xlu0 %538, %v410
        %v540 = vpop.permute.xlu0 %539
        %v542 = vmul.f32 %v536, %v540
        %v543 = vmul.f32 %v537, %v540
        %v544 = vadd.f32 %v523, %v542
        %v545 = vadd.f32 %v524, %v543
        %546 = vrot.lane.b32.xlu0 %v385, 112
        %v547 = vpop.permute.xlu0 %546
        %548 = vrot.lane.b32.xlu0 %v386, 112
        %v549 = vpop.permute.xlu0 %548
        %vm550 = vcmp.lt.s32.totalorder %v388, 112
        %v551 = vsel %vm550, %v547, %v549
        %v552 = vsel %vm550, %v549, %v547
        %v553 = vsel %vm396, 1, 0
        %v554 = vsel %vm397, 1, 0
        %vm555 = vcmp.eq.s32.totalorder %v553, 1
        %vm556 = vcmp.eq.s32.totalorder %v554, 1
        %v557 = vsel %vm555, %v551, 0.0
        %v558 = vsel %vm556, %v552, 0.0
        %559 = vset.pattern.permute.xlu0 7
        %560 = vperm.xlu0 %559, %v410
        %v561 = vpop.permute.xlu0 %560
        %v563 = vmul.f32 %v557, %v561
        %v564 = vmul.f32 %v558, %v561
        %v565 = vadd.f32 %v544, %v563
        %v566 = vadd.f32 %v545, %v564
        %567 = vrot.lane.b32.xlu0 %v385, 111
        %v568 = vpop.permute.xlu0 %567
        %569 = vrot.lane.b32.xlu0 %v386, 111
        %v570 = vpop.permute.xlu0 %569
        %vm571 = vcmp.lt.s32.totalorder %v388, 111
        %v572 = vsel %vm571, %v568, %v570
        %v573 = vsel %vm571, %v570, %v568
        %v574 = vsel %vm408, 1, 0
        %v575 = vsel %vm409, 1, 0
        %vm576 = vcmp.eq.s32.totalorder %v574, 1
        %vm577 = vcmp.eq.s32.totalorder %v575, 1
        %v578 = vsel %vm576, %v572, 0.0
        %v579 = vsel %vm577, %v573, 0.0
        %580 = vset.pattern.permute.xlu0 8
        %581 = vperm.xlu0 %580, %v410
        %v582 = vpop.permute.xlu0 %581
        %v584 = vmul.f32 %v578, %v582
        %v585 = vmul.f32 %v579, %v582
        %v586 = vadd.f32 %v565, %v584
        %v587 = vadd.f32 %v566, %v585
        %v588 = vld [vmem:[%s2] sm:$0xff]
        %590 = vset.pattern.permute.xlu0 0
        %591 = vperm.xlu0 %590, %v588
        %v592 = vpop.permute.xlu0 %591
        %v594 = vadd.f32 %v586, %v592
        %v595 = vadd.f32 %v587, %v592
        %v596 = vxor.u32 %v594, 2147483648
        %v597 = vxor.u32 %v595, 2147483648
        %v598 = vmul.f32 %v596, 1.442695
        %v599 = vpow.pop %v598
        %v600 = vmul.f32 %v597, 1.442695
        %v601 = vpow.pop %v600
        %v602 = vadd.f32 %v599, 1.0
        %v603 = vadd.f32 %v601, 1.0
        %v604 = vrcp.pop %v602
        %v605 = vmul.f32 1.0, %v604
        %v606 = vrcp.pop %v603
        %v607 = vmul.f32 1.0, %v606
        %v608 = vmul.f32 %v594, %v605
        %v609 = vmul.f32 %v595, %v607
        %v610 = vld [vmem:[%s3] sm:$0xff]
        %v611 = vld [vmem:[%s3 + $0x8] sm:$0xff]
        %v612 = vld [vmem:[%s4] sm:$0xff]
        %v613 = vld [vmem:[%s4 + $0x8] sm:$0xff]
        %615 = vset.pattern.permute.xlu0 0
        %616 = vperm.xlu0 %615, %v612
        %v617 = vpop.permute.xlu0 %616
        %620 = vset.pattern.permute.xlu0 0
        %621 = vperm.xlu0 %620, %v613
        %v622 = vpop.permute.xlu0 %621
        %vm624 = vcmask 64512
        %v626 = vsel %vm624, %v610, 0
        %v629 = vsel %vm624, %v611, 0
        %631 = vmatprep.subr.mxu0 %v609
        %632 = vmatpush1.msra.mxu0 %v608
        %633 = vmatprep.subr.mxu0 0.0
        %634 = vmatpush1.msra.mxu0 0.0
        %635 = vmatprep.subr.mxu0 0.0
        %636 = vmatpush1.msra.mxu0 0.0
        %637 = vmatprep.subr.mxu0 0.0
        %638 = vmatpush1.msra.mxu0 0.0
        %639 = vmatprep.subr.mxu0 0.0
        %640 = vmatpush1.msra.mxu0 0.0
        %641 = vmatprep.subr.mxu0 0.0
        %642 = vmatpush1.msra.mxu0 0.0
        %643 = vmatprep.subr.mxu0 0.0
        %644 = vmatpush1.msra.mxu0 0.0
        %645 = vmatprep.subr.mxu0 0.0
        %646 = vmatpush1.msra.mxu0 0.0
        %647 = vmatprep.subr.mxu0 0.0
        %648 = vmatpush1.msra.mxu0 0.0
        %649 = vmatprep.subr.mxu0 0.0
        %650 = vmatpush1.msra.mxu0 0.0
        %651 = vmatprep.subr.mxu0 0.0
        %652 = vmatpush1.msra.mxu0 0.0
        %653 = vmatprep.subr.mxu0 0.0
        %654 = vmatpush1.msra.mxu0 0.0
        %655 = vmatprep.subr.mxu0 0.0
        %656 = vmatpush1.msra.mxu0 0.0
        %657 = vmatprep.subr.mxu0 0.0
        %658 = vmatpush1.msra.mxu0 0.0
        %659 = vmatprep.subr.mxu0 0.0
        %660 = vmatpush1.msra.mxu0 0.0
        %661 = vmatprep.subr.mxu0 0.0
        %662 = vmatpush1.msra.mxu0 0.0
        %663 = vmatprep.subr.mxu0 0.0
        %664 = vmatpush1.msra.mxu0 0.0
        %665 = vmatprep.subr.mxu0 0.0
        %666 = vmatpush1.msra.mxu0 0.0
        %667 = vmatprep.subr.mxu0 0.0
        %668 = vmatpush1.msra.mxu0 0.0
        %669 = vmatprep.subr.mxu0 0.0
        %670 = vmatpush1.msra.mxu0 0.0
        %671 = vmatprep.subr.mxu0 0.0
        %672 = vmatpush1.msra.mxu0 0.0
        %673 = vmatprep.subr.mxu0 0.0
        %674 = vmatpush1.msra.mxu0 0.0
        %675 = vmatprep.subr.mxu0 0.0
        %676 = vmatpush1.msra.mxu0 0.0
        %677 = vmatprep.subr.mxu0 0.0
        %678 = vmatpush1.msra.mxu0 0.0
        %679 = vmatprep.subr.mxu0 0.0
        %680 = vmatpush1.msra.mxu0 0.0
        %681 = vmatprep.subr.mxu0 0.0
        %682 = vmatpush1.msra.mxu0 0.0
        %683 = vmatprep.subr.mxu0 0.0
        %684 = vmatpush1.msra.mxu0 0.0
        %685 = vmatprep.subr.mxu0 0.0
        %686 = vmatpush1.msra.mxu0 0.0
        %687 = vmatprep.subr.mxu0 0.0
        %688 = vmatpush1.msra.mxu0 0.0
        %689 = vmatprep.subr.mxu0 0.0
        %690 = vmatpush1.msra.mxu0 0.0
        %691 = vmatprep.subr.mxu0 0.0
        %692 = vmatpush1.msra.mxu0 0.0
        %693 = vmatprep.subr.mxu0 0.0
        %694 = vmatpush1.msra.mxu0 0.0
        %695 = vmatprep.mubr.f32.mxu0 0.0
        %696 = vmatmul.mubr.f32.gmra.mrb[0].mxu0 %v626
        %v697 = vpop.f32.mrb[0].mxu0
        %v698 = vadd.f32 %v617, %v697
        %v699 = vpop.f32.mrb[0].mxu0
        %v700 = vadd.f32 %v617, %v699
        %701 = vmatprep.mubr.f32.mxu0 0.0
        %702 = vmatmul.mubr.f32.gmra.mrb[0].mxu0 %v629
        %v703 = vpop.f32.mrb[0].mxu0
        %v704 = vadd.f32 %v622, %v703
        %v705 = vpop.f32.mrb[0].mxu0
        %v706 = vadd.f32 %v622, %v705
        %707 = vdwg.mxu0
        %v708 = vxor.u32 %v698, 2147483648
        %v709 = vxor.u32 %v700, 2147483648
        %v710 = vxor.u32 %v704, 2147483648
        %v711 = vxor.u32 %v706, 2147483648
        %v712 = vmul.f32 %v708, 1.442695
        %v713 = vpow.pop %v712
        %v714 = vmul.f32 %v709, 1.442695
        %v715 = vpow.pop %v714
        %v716 = vmul.f32 %v710, 1.442695
        %v717 = vpow.pop %v716
        %v718 = vmul.f32 %v711, 1.442695
        %v719 = vpow.pop %v718
        %v720 = vadd.f32 %v713, 1.0
        %v721 = vadd.f32 %v715, 1.0
        %v722 = vadd.f32 %v717, 1.0
        %v723 = vadd.f32 %v719, 1.0
        %v724 = vrcp.pop %v720
        %v725 = vmul.f32 1.0, %v724
        %v726 = vrcp.pop %v721
        %v727 = vmul.f32 1.0, %v726
        %v728 = vrcp.pop %v722
        %v729 = vmul.f32 1.0, %v728
        %v730 = vrcp.pop %v723
        %v731 = vmul.f32 1.0, %v730
        %v732 = vmul.f32 %v698, %v725
        %v733 = vmul.f32 %v700, %v727
        %v734 = vmul.f32 %v704, %v729
        %v735 = vmul.f32 %v706, %v731
        %v736 = vld [vmem:[%s5] sm:$0xff]
        %v737 = vld [vmem:[%s5 + $0x8] sm:$0xff]
        %738 = vrot.lane.b32.xlu0 %v732, 17
        %v739 = vpop.permute.xlu0 %738
        %740 = vrot.lane.b32.xlu0 %v734, 17
        %v741 = vpop.permute.xlu0 %740
        %742 = vrot.lane.b32.xlu0 %v733, 17
        %v743 = vpop.permute.xlu0 %742
        %744 = vrot.lane.b32.xlu0 %v735, 17
        %v745 = vpop.permute.xlu0 %744
        %v746 = vsel %vm415, %v739, %v743
        %v747 = vsel %vm415, %v741, %v745
        %v748 = vsel %vm415, %v743, %v739
        %v749 = vsel %vm415, %v745, %v741
        %v750 = vsel %vm420, %v748, 0.0
        %v751 = vsel %vm421, %v746, 0.0
        %v752 = vsel %vm420, %v749, 0.0
        %v753 = vsel %vm421, %v747, 0.0
        %755 = vset.pattern.permute.xlu0 0
        %756 = vperm.xlu0 %755, %v736
        %v757 = vpop.permute.xlu0 %756
        %760 = vset.pattern.permute.xlu0 0
        %761 = vperm.xlu0 %760, %v737
        %v762 = vpop.permute.xlu0 %761
        %v764 = vmul.f32 %v750, %v757
        %v765 = vmul.f32 %v751, %v757
        %v766 = vmul.f32 %v752, %v762
        %v767 = vmul.f32 %v753, %v762
        %v768 = vadd.f32 %v764, 0.0
        %v769 = vadd.f32 %v765, 0.0
        %v770 = vadd.f32 %v766, 0.0
        %v771 = vadd.f32 %v767, 0.0
        %772 = vrot.lane.b32.xlu0 %v732, 16
        %v773 = vpop.permute.xlu0 %772
        %774 = vrot.lane.b32.xlu0 %v734, 16
        %v775 = vpop.permute.xlu0 %774
        %776 = vrot.lane.b32.xlu0 %v733, 16
        %v777 = vpop.permute.xlu0 %776
        %778 = vrot.lane.b32.xlu0 %v735, 16
        %v779 = vpop.permute.xlu0 %778
        %v780 = vsel %vm437, %v773, %v777
        %v781 = vsel %vm437, %v775, %v779
        %v782 = vsel %vm437, %v777, %v773
        %v783 = vsel %vm437, %v779, %v775
        %v784 = vsel %vm442, %v782, 0.0
        %v785 = vsel %vm443, %v780, 0.0
        %v786 = vsel %vm442, %v783, 0.0
        %v787 = vsel %vm443, %v781, 0.0
        %788 = vset.pattern.permute.xlu0 1
        %789 = vperm.xlu0 %788, %v736
        %v790 = vpop.permute.xlu0 %789
        %792 = vset.pattern.permute.xlu0 1
        %793 = vperm.xlu0 %792, %v737
        %v794 = vpop.permute.xlu0 %793
        %v796 = vmul.f32 %v784, %v790
        %v797 = vmul.f32 %v785, %v790
        %v798 = vmul.f32 %v786, %v794
        %v799 = vmul.f32 %v787, %v794
        %v800 = vadd.f32 %v768, %v796
        %v801 = vadd.f32 %v769, %v797
        %v802 = vadd.f32 %v770, %v798
        %v803 = vadd.f32 %v771, %v799
        %804 = vrot.lane.b32.xlu0 %v732, 15
        %v805 = vpop.permute.xlu0 %804
        %806 = vrot.lane.b32.xlu0 %v734, 15
        %v807 = vpop.permute.xlu0 %806
        %808 = vrot.lane.b32.xlu0 %v733, 15
        %v809 = vpop.permute.xlu0 %808
        %810 = vrot.lane.b32.xlu0 %v735, 15
        %v811 = vpop.permute.xlu0 %810
        %v812 = vsel %vm458, %v805, %v809
        %v813 = vsel %vm458, %v807, %v811
        %v814 = vsel %vm458, %v809, %v805
        %v815 = vsel %vm458, %v811, %v807
        %v816 = vsel %vm463, %v814, 0.0
        %v817 = vsel %vm464, %v812, 0.0
        %v818 = vsel %vm463, %v815, 0.0
        %v819 = vsel %vm464, %v813, 0.0
        %820 = vset.pattern.permute.xlu0 2
        %821 = vperm.xlu0 %820, %v736
        %v822 = vpop.permute.xlu0 %821
        %824 = vset.pattern.permute.xlu0 2
        %825 = vperm.xlu0 %824, %v737
        %v826 = vpop.permute.xlu0 %825
        %v828 = vmul.f32 %v816, %v822
        %v829 = vmul.f32 %v817, %v822
        %v830 = vmul.f32 %v818, %v826
        %v831 = vmul.f32 %v819, %v826
        %v832 = vadd.f32 %v800, %v828
        %v833 = vadd.f32 %v801, %v829
        %v834 = vadd.f32 %v802, %v830
        %v835 = vadd.f32 %v803, %v831
        %836 = vrot.lane.b32.xlu0 %v732, 1
        %v837 = vpop.permute.xlu0 %836
        %838 = vrot.lane.b32.xlu0 %v734, 1
        %v839 = vpop.permute.xlu0 %838
        %840 = vrot.lane.b32.xlu0 %v733, 1
        %v841 = vpop.permute.xlu0 %840
        %842 = vrot.lane.b32.xlu0 %v735, 1
        %v843 = vpop.permute.xlu0 %842
        %v844 = vsel %vm479, %v837, %v841
        %v845 = vsel %vm479, %v839, %v843
        %v846 = vsel %vm479, %v841, %v837
        %v847 = vsel %vm479, %v843, %v839
        %v848 = vsel %vm484, %v846, 0.0
        %v849 = vsel %vm485, %v844, 0.0
        %v850 = vsel %vm484, %v847, 0.0
        %v851 = vsel %vm485, %v845, 0.0
        %852 = vset.pattern.permute.xlu0 3
        %853 = vperm.xlu0 %852, %v736
        %v854 = vpop.permute.xlu0 %853
        %856 = vset.pattern.permute.xlu0 3
        %857 = vperm.xlu0 %856, %v737
        %v858 = vpop.permute.xlu0 %857
        %v860 = vmul.f32 %v848, %v854
        %v861 = vmul.f32 %v849, %v854
        %v862 = vmul.f32 %v850, %v858
        %v863 = vmul.f32 %v851, %v858
        %v864 = vadd.f32 %v832, %v860
        %v865 = vadd.f32 %v833, %v861
        %v866 = vadd.f32 %v834, %v862
        %v867 = vadd.f32 %v835, %v863
        %868 = vset.pattern.permute.xlu0 4
        %869 = vperm.xlu0 %868, %v736
        %v870 = vpop.permute.xlu0 %869
        %872 = vset.pattern.permute.xlu0 4
        %873 = vperm.xlu0 %872, %v737
        %v874 = vpop.permute.xlu0 %873
        %v876 = vmul.f32 %v732, %v870
        %v877 = vmul.f32 %v733, %v870
        %v878 = vmul.f32 %v734, %v874
        %v879 = vmul.f32 %v735, %v874
        %v880 = vadd.f32 %v864, %v876
        %v881 = vadd.f32 %v865, %v877
        %v882 = vadd.f32 %v866, %v878
        %v883 = vadd.f32 %v867, %v879
        %884 = vrot.lane.b32.xlu0 %v732, 127
        %v885 = vpop.permute.xlu0 %884
        %886 = vrot.lane.b32.xlu0 %v734, 127
        %v887 = vpop.permute.xlu0 %886
        %888 = vrot.lane.b32.xlu0 %v733, 127
        %v889 = vpop.permute.xlu0 %888
        %890 = vrot.lane.b32.xlu0 %v735, 127
        %v891 = vpop.permute.xlu0 %890
        %v892 = vsel %vm508, %v885, %v889
        %v893 = vsel %vm508, %v887, %v891
        %v894 = vsel %vm508, %v889, %v885
        %v895 = vsel %vm508, %v891, %v887
        %v896 = vsel %vm513, %v892, 0.0
        %v897 = vsel %vm514, %v894, 0.0
        %v898 = vsel %vm513, %v893, 0.0
        %v899 = vsel %vm514, %v895, 0.0
        %900 = vset.pattern.permute.xlu0 5
        %901 = vperm.xlu0 %900, %v736
        %v902 = vpop.permute.xlu0 %901
        %904 = vset.pattern.permute.xlu0 5
        %905 = vperm.xlu0 %904, %v737
        %v906 = vpop.permute.xlu0 %905
        %v908 = vmul.f32 %v896, %v902
        %v909 = vmul.f32 %v897, %v902
        %v910 = vmul.f32 %v898, %v906
        %v911 = vmul.f32 %v899, %v906
        %v912 = vadd.f32 %v880, %v908
        %v913 = vadd.f32 %v881, %v909
        %v914 = vadd.f32 %v882, %v910
        %v915 = vadd.f32 %v883, %v911
        %916 = vrot.lane.b32.xlu0 %v732, 113
        %v917 = vpop.permute.xlu0 %916
        %918 = vrot.lane.b32.xlu0 %v734, 113
        %v919 = vpop.permute.xlu0 %918
        %920 = vrot.lane.b32.xlu0 %v733, 113
        %v921 = vpop.permute.xlu0 %920
        %922 = vrot.lane.b32.xlu0 %v735, 113
        %v923 = vpop.permute.xlu0 %922
        %v924 = vsel %vm529, %v917, %v921
        %v925 = vsel %vm529, %v919, %v923
        %v926 = vsel %vm529, %v921, %v917
        %v927 = vsel %vm529, %v923, %v919
        %v928 = vsel %vm534, %v924, 0.0
        %v929 = vsel %vm535, %v926, 0.0
        %v930 = vsel %vm534, %v925, 0.0
        %v931 = vsel %vm535, %v927, 0.0
        %932 = vset.pattern.permute.xlu0 6
        %933 = vperm.xlu0 %932, %v736
        %v934 = vpop.permute.xlu0 %933
        %936 = vset.pattern.permute.xlu0 6
        %937 = vperm.xlu0 %936, %v737
        %v938 = vpop.permute.xlu0 %937
        %v940 = vmul.f32 %v928, %v934
        %v941 = vmul.f32 %v929, %v934
        %v942 = vmul.f32 %v930, %v938
        %v943 = vmul.f32 %v931, %v938
        %v944 = vadd.f32 %v912, %v940
        %v945 = vadd.f32 %v913, %v941
        %v946 = vadd.f32 %v914, %v942
        %v947 = vadd.f32 %v915, %v943
        %948 = vrot.lane.b32.xlu0 %v732, 112
        %v949 = vpop.permute.xlu0 %948
        %950 = vrot.lane.b32.xlu0 %v734, 112
        %v951 = vpop.permute.xlu0 %950
        %952 = vrot.lane.b32.xlu0 %v733, 112
        %v953 = vpop.permute.xlu0 %952
        %954 = vrot.lane.b32.xlu0 %v735, 112
        %v955 = vpop.permute.xlu0 %954
        %v956 = vsel %vm550, %v949, %v953
        %v957 = vsel %vm550, %v951, %v955
        %v958 = vsel %vm550, %v953, %v949
        %v959 = vsel %vm550, %v955, %v951
        %v960 = vsel %vm555, %v956, 0.0
        %v961 = vsel %vm556, %v958, 0.0
        %v962 = vsel %vm555, %v957, 0.0
        %v963 = vsel %vm556, %v959, 0.0
        %964 = vset.pattern.permute.xlu0 7
        %965 = vperm.xlu0 %964, %v736
        %v966 = vpop.permute.xlu0 %965
        %968 = vset.pattern.permute.xlu0 7
        %969 = vperm.xlu0 %968, %v737
        %v970 = vpop.permute.xlu0 %969
        %v972 = vmul.f32 %v960, %v966
        %v973 = vmul.f32 %v961, %v966
        %v974 = vmul.f32 %v962, %v970
        %v975 = vmul.f32 %v963, %v970
        %v976 = vadd.f32 %v944, %v972
        %v977 = vadd.f32 %v945, %v973
        %v978 = vadd.f32 %v946, %v974
        %v979 = vadd.f32 %v947, %v975
        %980 = vrot.lane.b32.xlu0 %v732, 111
        %v981 = vpop.permute.xlu0 %980
        %982 = vrot.lane.b32.xlu0 %v734, 111
        %v983 = vpop.permute.xlu0 %982
        %984 = vrot.lane.b32.xlu0 %v733, 111
        %v985 = vpop.permute.xlu0 %984
        %986 = vrot.lane.b32.xlu0 %v735, 111
        %v987 = vpop.permute.xlu0 %986
        %v988 = vsel %vm571, %v981, %v985
        %v989 = vsel %vm571, %v983, %v987
        %v990 = vsel %vm571, %v985, %v981
        %v991 = vsel %vm571, %v987, %v983
        %v992 = vsel %vm576, %v988, 0.0
        %v993 = vsel %vm577, %v990, 0.0
        %v994 = vsel %vm576, %v989, 0.0
        %v995 = vsel %vm577, %v991, 0.0
        %996 = vset.pattern.permute.xlu0 8
        %997 = vperm.xlu0 %996, %v736
        %v998 = vpop.permute.xlu0 %997
        %1000 = vset.pattern.permute.xlu0 8
        %1001 = vperm.xlu0 %1000, %v737
        %v1002 = vpop.permute.xlu0 %1001
        %v1004 = vmul.f32 %v992, %v998
        %v1005 = vmul.f32 %v993, %v998
        %v1006 = vmul.f32 %v994, %v1002
        %v1007 = vmul.f32 %v995, %v1002
        %v1008 = vadd.f32 %v976, %v1004
        %v1009 = vadd.f32 %v977, %v1005
        %v1010 = vadd.f32 %v978, %v1006
        %v1011 = vadd.f32 %v979, %v1007
        %v1012 = vld [vmem:[%s6] sm:$0xff]
        %v1013 = vld [vmem:[%s6 + $0x8] sm:$0xff]
        %1015 = vset.pattern.permute.xlu0 0
        %1016 = vperm.xlu0 %1015, %v1012
        %v1017 = vpop.permute.xlu0 %1016
        %1020 = vset.pattern.permute.xlu0 0
        %1021 = vperm.xlu0 %1020, %v1013
        %v1022 = vpop.permute.xlu0 %1021
        %v1024 = vadd.f32 %v1008, %v1017
        %v1025 = vadd.f32 %v1009, %v1017
        %v1026 = vadd.f32 %v1010, %v1022
        %v1027 = vadd.f32 %v1011, %v1022
        %v1028 = vxor.u32 %v1024, 2147483648
        %v1029 = vxor.u32 %v1025, 2147483648
        %v1030 = vxor.u32 %v1026, 2147483648
        %v1031 = vxor.u32 %v1027, 2147483648
        %v1032 = vmul.f32 %v1028, 1.442695
        %v1033 = vpow.pop %v1032
        %v1034 = vmul.f32 %v1029, 1.442695
        %v1035 = vpow.pop %v1034
        %v1036 = vmul.f32 %v1030, 1.442695
        %v1037 = vpow.pop %v1036
        %v1038 = vmul.f32 %v1031, 1.442695
        %v1039 = vpow.pop %v1038
        %v1040 = vadd.f32 %v1033, 1.0
        %v1041 = vadd.f32 %v1035, 1.0
        %v1042 = vadd.f32 %v1037, 1.0
        %v1043 = vadd.f32 %v1039, 1.0
        %v1044 = vrcp.pop %v1040
        %v1045 = vmul.f32 1.0, %v1044
        %v1046 = vrcp.pop %v1041
        %v1047 = vmul.f32 1.0, %v1046
        %v1048 = vrcp.pop %v1042
        %v1049 = vmul.f32 1.0, %v1048
        %v1050 = vrcp.pop %v1043
        %v1051 = vmul.f32 1.0, %v1050
        %v1052 = vmul.f32 %v1024, %v1045
        %v1053 = vmul.f32 %v1025, %v1047
        %v1054 = vmul.f32 %v1026, %v1049
        %v1055 = vmul.f32 %v1027, %v1051
        %v1056 = vld [vmem:[%s7] sm:$0xff]
        %v1057 = vld [vmem:[%s7 + $0x8] sm:$0xff]
        %v1058 = vld [vmem:[%s8] sm:$0xff]
        %v1059 = vld [vmem:[%s8 + $0x8] sm:$0xff]
        %1061 = vset.pattern.permute.xlu0 0
        %1062 = vperm.xlu0 %1061, %v1058
        %v1063 = vpop.permute.xlu0 %1062
        %1066 = vset.pattern.permute.xlu0 0
        %1067 = vperm.xlu0 %1066, %v1059
        %v1068 = vpop.permute.xlu0 %1067
        %vm1070 = vcmask 130048
        %v1072 = vsel %vm1070, %v1056, 0
        %v1075 = vsel %vm1070, %v1057, 0
        %1077 = vmatprep.subr.mxu0 %v1053
        %1078 = vmatpush1.msra.mxu0 %v1052
        %1079 = vmatprep.subr.mxu0 %v1055
        %1080 = vmatpush1.msra.mxu0 %v1054
        %1081 = vmatprep.subr.mxu0 0.0
        %1082 = vmatpush1.msra.mxu0 0.0
        %1083 = vmatprep.subr.mxu0 0.0
        %1084 = vmatpush1.msra.mxu0 0.0
        %1085 = vmatprep.subr.mxu0 0.0
        %1086 = vmatpush1.msra.mxu0 0.0
        %1087 = vmatprep.subr.mxu0 0.0
        %1088 = vmatpush1.msra.mxu0 0.0
        %1089 = vmatprep.subr.mxu0 0.0
        %1090 = vmatpush1.msra.mxu0 0.0
        %1091 = vmatprep.subr.mxu0 0.0
        %1092 = vmatpush1.msra.mxu0 0.0
        %1093 = vmatprep.subr.mxu0 0.0
        %1094 = vmatpush1.msra.mxu0 0.0
        %1095 = vmatprep.subr.mxu0 0.0
        %1096 = vmatpush1.msra.mxu0 0.0
        %1097 = vmatprep.subr.mxu0 0.0
        %1098 = vmatpush1.msra.mxu0 0.0
        %1099 = vmatprep.subr.mxu0 0.0
        %1100 = vmatpush1.msra.mxu0 0.0
        %1101 = vmatprep.subr.mxu0 0.0
        %1102 = vmatpush1.msra.mxu0 0.0
        %1103 = vmatprep.subr.mxu0 0.0
        %1104 = vmatpush1.msra.mxu0 0.0
        %1105 = vmatprep.subr.mxu0 0.0
        %1106 = vmatpush1.msra.mxu0 0.0
        %1107 = vmatprep.subr.mxu0 0.0
        %1108 = vmatpush1.msra.mxu0 0.0
        %1109 = vmatprep.subr.mxu0 0.0
        %1110 = vmatpush1.msra.mxu0 0.0
        %1111 = vmatprep.subr.mxu0 0.0
        %1112 = vmatpush1.msra.mxu0 0.0
        %1113 = vmatprep.subr.mxu0 0.0
        %1114 = vmatpush1.msra.mxu0 0.0
        %1115 = vmatprep.subr.mxu0 0.0
        %1116 = vmatpush1.msra.mxu0 0.0
        %1117 = vmatprep.subr.mxu0 0.0
        %1118 = vmatpush1.msra.mxu0 0.0
        %1119 = vmatprep.subr.mxu0 0.0
        %1120 = vmatpush1.msra.mxu0 0.0
        %1121 = vmatprep.subr.mxu0 0.0
        %1122 = vmatpush1.msra.mxu0 0.0
        %1123 = vmatprep.subr.mxu0 0.0
        %1124 = vmatpush1.msra.mxu0 0.0
        %1125 = vmatprep.subr.mxu0 0.0
        %1126 = vmatpush1.msra.mxu0 0.0
        %1127 = vmatprep.subr.mxu0 0.0
        %1128 = vmatpush1.msra.mxu0 0.0
        %1129 = vmatprep.subr.mxu0 0.0
        %1130 = vmatpush1.msra.mxu0 0.0
        %1131 = vmatprep.subr.mxu0 0.0
        %1132 = vmatpush1.msra.mxu0 0.0
        %1133 = vmatprep.subr.mxu0 0.0
        %1134 = vmatpush1.msra.mxu0 0.0
        %1135 = vmatprep.subr.mxu0 0.0
        %1136 = vmatpush1.msra.mxu0 0.0
        %1137 = vmatprep.subr.mxu0 0.0
        %1138 = vmatpush1.msra.mxu0 0.0
        %1139 = vmatprep.subr.mxu0 0.0
        %1140 = vmatpush1.msra.mxu0 0.0
        %1141 = vmatprep.mubr.f32.mxu0 0.0
        %1142 = vmatmul.mubr.f32.gmra.mrb[0].mxu0 %v1072
        %v1143 = vpop.f32.mrb[0].mxu0
        %v1144 = vadd.f32 %v1063, %v1143
        %v1145 = vpop.f32.mrb[0].mxu0
        %v1146 = vadd.f32 %v1063, %v1145
        %1147 = vmatprep.mubr.f32.mxu0 0.0
        %1148 = vmatmul.mubr.f32.gmra.mrb[0].mxu0 %v1075
        %v1149 = vpop.f32.mrb[0].mxu0
        %v1150 = vadd.f32 %v1068, %v1149
        %v1151 = vpop.f32.mrb[0].mxu0
        %v1152 = vadd.f32 %v1068, %v1151
        %1153 = vdwg.mxu0
        %v1154 = vxor.u32 %v1144, 2147483648
        %v1155 = vxor.u32 %v1146, 2147483648
        %v1156 = vxor.u32 %v1150, 2147483648
        %v1157 = vxor.u32 %v1152, 2147483648
        %v1158 = vmul.f32 %v1154, 1.442695
        %v1159 = vpow.pop %v1158
        %v1160 = vmul.f32 %v1155, 1.442695
        %v1161 = vpow.pop %v1160
        %v1162 = vmul.f32 %v1156, 1.442695
        %v1163 = vpow.pop %v1162
        %v1164 = vmul.f32 %v1157, 1.442695
        %v1165 = vpow.pop %v1164
        %v1166 = vadd.f32 %v1159, 1.0
        %v1167 = vadd.f32 %v1161, 1.0
        %v1168 = vadd.f32 %v1163, 1.0
        %v1169 = vadd.f32 %v1165, 1.0
        %v1170 = vrcp.pop %v1166
        %v1171 = vmul.f32 1.0, %v1170
        %v1172 = vrcp.pop %v1167
        %v1173 = vmul.f32 1.0, %v1172
        %v1174 = vrcp.pop %v1168
        %v1175 = vmul.f32 1.0, %v1174
        %v1176 = vrcp.pop %v1169
        %v1177 = vmul.f32 1.0, %v1176
        %v1178 = vmul.f32 %v1144, %v1171
        %v1179 = vmul.f32 %v1146, %v1173
        %v1180 = vmul.f32 %v1150, %v1175
        %v1181 = vmul.f32 %v1152, %v1177
        %v1182 = vld [vmem:[%s9] sm:$0xff]
        %v1183 = vld [vmem:[%s9 + $0x8] sm:$0xff]
        %v1184 = vld [vmem:[%s10] sm:$0xff]
        %v1185 = vld [vmem:[%s10 + $0x8] sm:$0xff]
        %1187 = vset.pattern.permute.xlu0 0
        %1188 = vperm.xlu0 %1187, %v1184
        %v1189 = vpop.permute.xlu0 %1188
        %1192 = vset.pattern.permute.xlu0 0
        %1193 = vperm.xlu0 %1192, %v1185
        %v1194 = vpop.permute.xlu0 %1193
        %v1197 = vsel %vm1070, %v1182, 0
        %v1200 = vsel %vm1070, %v1183, 0
        %1202 = vmatprep.subr.mxu0 %v1179
        %1203 = vmatpush1.msra.mxu0 %v1178
        %1204 = vmatprep.subr.mxu0 %v1181
        %1205 = vmatpush1.msra.mxu0 %v1180
        %1206 = vmatprep.subr.mxu0 0.0
        %1207 = vmatpush1.msra.mxu0 0.0
        %1208 = vmatprep.subr.mxu0 0.0
        %1209 = vmatpush1.msra.mxu0 0.0
        %1210 = vmatprep.subr.mxu0 0.0
        %1211 = vmatpush1.msra.mxu0 0.0
        %1212 = vmatprep.subr.mxu0 0.0
        %1213 = vmatpush1.msra.mxu0 0.0
        %1214 = vmatprep.subr.mxu0 0.0
        %1215 = vmatpush1.msra.mxu0 0.0
        %1216 = vmatprep.subr.mxu0 0.0
        %1217 = vmatpush1.msra.mxu0 0.0
        %1218 = vmatprep.subr.mxu0 0.0
        %1219 = vmatpush1.msra.mxu0 0.0
        %1220 = vmatprep.subr.mxu0 0.0
        %1221 = vmatpush1.msra.mxu0 0.0
        %1222 = vmatprep.subr.mxu0 0.0
        %1223 = vmatpush1.msra.mxu0 0.0
        %1224 = vmatprep.subr.mxu0 0.0
        %1225 = vmatpush1.msra.mxu0 0.0
        %1226 = vmatprep.subr.mxu0 0.0
        %1227 = vmatpush1.msra.mxu0 0.0
        %1228 = vmatprep.subr.mxu0 0.0
        %1229 = vmatpush1.msra.mxu0 0.0
        %1230 = vmatprep.subr.mxu0 0.0
        %1231 = vmatpush1.msra.mxu0 0.0
        %1232 = vmatprep.subr.mxu0 0.0
        %1233 = vmatpush1.msra.mxu0 0.0
        %1234 = vmatprep.subr.mxu0 0.0
        %1235 = vmatpush1.msra.mxu0 0.0
        %1236 = vmatprep.subr.mxu0 0.0
        %1237 = vmatpush1.msra.mxu0 0.0
        %1238 = vmatprep.subr.mxu0 0.0
        %1239 = vmatpush1.msra.mxu0 0.0
        %1240 = vmatprep.subr.mxu0 0.0
        %1241 = vmatpush1.msra.mxu0 0.0
        %1242 = vmatprep.subr.mxu0 0.0
        %1243 = vmatpush1.msra.mxu0 0.0
        %1244 = vmatprep.subr.mxu0 0.0
        %1245 = vmatpush1.msra.mxu0 0.0
        %1246 = vmatprep.subr.mxu0 0.0
        %1247 = vmatpush1.msra.mxu0 0.0
        %1248 = vmatprep.subr.mxu0 0.0
        %1249 = vmatpush1.msra.mxu0 0.0
        %1250 = vmatprep.subr.mxu0 0.0
        %1251 = vmatpush1.msra.mxu0 0.0
        %1252 = vmatprep.subr.mxu0 0.0
        %1253 = vmatpush1.msra.mxu0 0.0
        %1254 = vmatprep.subr.mxu0 0.0
        %1255 = vmatpush1.msra.mxu0 0.0
        %1256 = vmatprep.subr.mxu0 0.0
        %1257 = vmatpush1.msra.mxu0 0.0
        %1258 = vmatprep.subr.mxu0 0.0
        %1259 = vmatpush1.msra.mxu0 0.0
        %1260 = vmatprep.subr.mxu0 0.0
        %1261 = vmatpush1.msra.mxu0 0.0
        %1262 = vmatprep.subr.mxu0 0.0
        %1263 = vmatpush1.msra.mxu0 0.0
        %1264 = vmatprep.subr.mxu0 0.0
        %1265 = vmatpush1.msra.mxu0 0.0
        %1266 = vmatprep.mubr.f32.mxu0 0.0
        %1267 = vmatmul.mubr.f32.gmra.mrb[0].mxu0 %v1197
        %v1268 = vpop.f32.mrb[0].mxu0
        %v1269 = vadd.f32 %v1189, %v1268
        %v1270 = vpop.f32.mrb[0].mxu0
        %v1271 = vadd.f32 %v1189, %v1270
        %1272 = vmatprep.mubr.f32.mxu0 0.0
        %1273 = vmatmul.mubr.f32.gmra.mrb[0].mxu0 %v1200
        %v1274 = vpop.f32.mrb[0].mxu0
        %v1275 = vadd.f32 %v1194, %v1274
        %v1276 = vpop.f32.mrb[0].mxu0
        %v1277 = vadd.f32 %v1194, %v1276
        %1278 = vdwg.mxu0
        %1279 = vst [vmem:[%s379] sm:$0xff] %v1269
        %1280 = vst [vmem:[%s379 + $0x8] sm:$0xff] %v1271
        %1281 = vst [vmem:[%s379 + $0x10] sm:$0xff] %v1275
        %1282 = vst [vmem:[%s379 + $0x18] sm:$0xff] %v1277
        %s1283 = sand.u32 %s269, 1
        %s1284 = scalar_lea.sflag [#allocation3], %s1283
        %s1285 = sand.u32 %s269, 1
        %s1286 = smul.addr %s1285, 32
        %s1287 = scalar_lea.vmem [#allocation2], %s1286
        // Predicated region
        $region65: #{tpu_custom_call.1} parent=63 // pred_check
          %p1288 = pneg %p279
        $region66: #{tpu_custom_call.1} parent=63 // pred_check_branch
          %1290 = sbr.rel (%p1288) target = $region68
        $region67: #{tpu_custom_call.1} parent=63 // pred_region
          %s1292 = ssub.s32 512, 512
          %1293 = vsyncadd %s1284, %s1292
          %s1294 = smul.addr %s25, 4
          %s1295 = smul.addr %s1294, 128
          %s1296 = scalar_lea.hbm %s11, %s1295
          %s1297 = sshll.u32 %s1287, 4
          %s1298 = int_to_ptr.vmem [resolvable:$true] %s1297
          %1303 = dma.vmem_to_hbm [thread:$0]  %s1298, 512, %s1296, %s1284, 256, 256, 16
        $region68: #{tpu_custom_call.1} parent=63 // pred_fallthru
          _
      $region64: #{tpu_custom_call.1} parent=5 // pred_fallthru
        _
      %p1304 = scmp.le.s32.totalorder 2, %s20
      // Predicated region
      $region69: #{tpu_custom_call.1} parent=5 // pred_check
        %p1305 = pneg %p1304
      $region70: #{tpu_custom_call.1} parent=5 // pred_check_branch
        %1307 = sbr.rel (%p1305) target = $region72
      $region71: #{tpu_custom_call.1} parent=5 // pred_region
        %s1308 = ssub.s32 %s20, 2
        // Predicated region
        $region73: #{tpu_custom_call.1} parent=71 // pred_check
          %p1309 = pneg %p285
        $region74: #{tpu_custom_call.1} parent=71 // pred_check_branch
          %1311 = sbr.rel (%p1309) target = $region76
        $region75: #{tpu_custom_call.1} parent=71 // pred_region
          %s1312 = sand.u32 %s270, 1
          %s1313 = scalar_lea.sflag [#allocation3], %s1312
          %s1314 = sand.u32 %s270, 1
          %s1315 = smul.addr %s1314, 32
          %s1316 = scalar_lea.vmem [#allocation2], %s1315
          %1317 = dma.done %s1313, 512
        $region76: #{tpu_custom_call.1} parent=71 // pred_fallthru
          _
      $region72: #{tpu_custom_call.1} parent=5 // pred_fallthru
        _
    $region6: #{tpu_custom_call.1} parent=1 // loop_footer
      %s24 = sadd.s32 1, %s20
    $region7: #{tpu_custom_call.1} parent=1 // loop_footer_branch
      %19 = sbr.rel target = $region3
    $region8: #{tpu_custom_call.1} parent=1 // loop_exit
      _
    %1318 = vsyncpa [#allocation3], 1
    %s1319 = scalar_lea.sflag [#allocation3], 1
    %1320 = vsyncpa %s1319, 1

</llo_original>
